<compile_context>
chip_gen: v6e
topology: v6e:2x2x1
jax: 0.10.0
libtpu: 0.0.40
codegen_flags: <defaults>
</compile_context>

<pallas_src>
import math

import jax
import jax.numpy as jnp
from jax.experimental import pallas as pl
from jax.experimental.pallas import tpu as pltpu


def _gtv1_attn_kernel(xq_ref, xkv_ref, e_ref, kbias_ref, qmask_ref,
                      wq_ref, wvk_ref, we_ref, o_ref,
                      q_sc, m_sc, l_sc, acc_sc):
    # xq_ref:    (1, N,  H)    bf16  node features (all query nodes of this graph)
    # xkv_ref:   (1, TJ, H)    bf16  node features for the current key tile
    # e_ref:     (1, N, TJ, H) bf16  edge features for the current key tile
    # kbias_ref: (1, 1, TJ)    f32   additive key mask (0 valid / -1e9 padded)
    # qmask_ref: (1, N, 1)     f32   query-node mask (zeroes masked output rows)
    # wq_ref:    (H, D)        bf16  query projection
    # wvk_ref:   (H, DP+D)     bf16  fused [Wv | zero-pad, Wk] projection
    # we_ref:    (H, D)        bf16  edge projection
    # o_ref:     (1, N, DP)    f32   lane-dense (padded) head output
    # q_sc: (N, D) f32 cached scaled query projection (computed once per graph)
    # m_sc/l_sc: (N, 1) f32, acc_sc: (N, DP) f32  online-softmax running state
    j = pl.program_id(1)
    nj = pl.num_programs(1)

    N, H = xq_ref.shape[1], xq_ref.shape[2]
    TJ = xkv_ref.shape[1]
    D = we_ref.shape[1]
    DP = acc_sc.shape[1]

    @pl.when(j == 0)
    def _init():
        m_sc[...] = jnp.full(m_sc.shape, -jnp.inf, m_sc.dtype)
        l_sc[...] = jnp.zeros(l_sc.shape, l_sc.dtype)
        acc_sc[...] = jnp.zeros(acc_sc.shape, acc_sc.dtype)
        # Query projection computed once per graph, 1/sqrt(D) folded in.
        q_sc[...] = jnp.dot(xq_ref[0], wq_ref[...],
                            preferred_element_type=jnp.float32) * jnp.float32(
                                1.0 / math.sqrt(D))

    # Fused key/value projection for this key tile (bf16 MXU, f32 accumulate).
    kv = jnp.dot(xkv_ref[0], wvk_ref[...], preferred_element_type=jnp.float32)  # (TJ, DP+D)
    v = kv[:, :DP].astype(jnp.bfloat16)                                          # zero-padded cols
    k = kv[:, DP:DP + D]                                                          # (TJ, D)

    # Edge projection for this key tile (bf16 MXU, f32 accumulate).
    e_proj = jnp.dot(e_ref[0].reshape(N * TJ, H), we_ref[...],
                     preferred_element_type=jnp.float32).reshape(N, TJ, D)

    # score_ij = sum_d q_id * (k_jd * e_ijd): one elementwise pass + batched matvec.
    km = e_proj * k[None, :, :]                                                   # (N, TJ, D)
    q = q_sc[...]
    scores = jax.lax.dot_general(
        q.reshape(N, 1, D), km,
        dimension_numbers=(((2,), (2,)), ((0,), (0,))),
        preferred_element_type=jnp.float32)[:, 0, :]                              # (N, TJ)
    scores = scores + kbias_ref[0]                                                # key-mask bias

    # Online softmax over key tiles.
    m_prev = m_sc[...]
    m_new = jnp.maximum(m_prev, jnp.max(scores, axis=-1, keepdims=True))
    alpha = jnp.exp(m_prev - m_new)
    p = jnp.exp(scores - m_new)
    l_sc[...] = alpha * l_sc[...] + jnp.sum(p, axis=-1, keepdims=True)
    acc_sc[...] = alpha * acc_sc[...] + jnp.dot(
        p.astype(jnp.bfloat16), v, preferred_element_type=jnp.float32)
    m_sc[...] = m_new

    @pl.when(j == nj - 1)
    def _finalize():
        inv_l = pl.reciprocal(l_sc[...], approx=True)
        o_ref[0] = (acc_sc[...] * inv_l * qmask_ref[0]).astype(o_ref.dtype)


def _choose_key_tile(n, h, d, budget_bytes=20 * 1024 * 1024):
    """Largest key tile TJ (multiple of 128) whose streamed edge tile + f32 temps fit."""
    if n <= 128 or n % 128 != 0:
        return n
    for tj in (512, 256, 128):
        if n % tj == 0:
            need = 2 * n * tj * h * 2 + 2 * n * tj * d * 4 + 8 * n * tj * 4
            if need <= budget_bytes:
                return tj
    return 128


def _vmem_limit_bytes(n, tj, h, d, dp):
    est = (2 * n * tj * h * 2              # double-buffered bf16 edge tile
           + 4 * (n + tj) * h * 2          # node-feature blocks
           + 2 * n * dp * 4                # double-buffered output block
           + n * dp * 4 + 3 * n * 128 * 4  # accumulator + q/m/l scratch (lane padded)
           + 2 * n * tj * d * 4            # e_proj / km f32 temporaries
           + 8 * n * tj * 4                # scores / p temporaries
           + 4 * (dp + 3 * d) * h * 2      # weights
           + (2 << 20))                    # slack
    try:
        cap = pltpu.get_tpu_info().vmem_capacity_bytes    # 64 MiB on v7x, 128 MiB v5e/v6e
    except Exception:
        cap = 64 * 1024 * 1024
    return int(min(max(est, 32 * 1024 * 1024), int(0.75 * cap)))


def attention_head_gtv1(x, e, node_mask, wq, wk, wv, we):
    """x: (B,N,H), e: (B,N,N,H), node_mask: (B,N), weights: (H,D). Returns (B,N,D) f32."""
    B, N, H = x.shape
    D = wq.shape[1]
    DP = ((D + 127) // 128) * 128          # lane-dense padded head dim (>=128)
    TJ = _choose_key_tile(N, H, D)
    NJ = N // TJ

    cd = jnp.bfloat16
    x_bf = x.astype(cd)
    e_bf = e.astype(cd)
    we_bf = we.astype(cd)
    wq_bf = wq.astype(cd)
    # Fused key/value projection weight, laid out [ V (zero-padded to DP lanes) | K ].
    w_v_pad = jnp.zeros((H, DP), cd).at[:, :D].set(wv.astype(cd))
    w_vk = jnp.concatenate([w_v_pad, wk.astype(cd)], axis=1)             # (H, DP+D)

    mask_f = node_mask.astype(jnp.float32)
    k_bias = ((mask_f - 1.0) * 1e9).reshape(B, 1, N)    # additive key-mask bias (0 / -1e9)
    q_mask = mask_f.reshape(B, N, 1)

    grid_spec = pltpu.PrefetchScalarGridSpec(
        num_scalar_prefetch=0,
        grid=(B, NJ),
        in_specs=[
            pl.BlockSpec((1, N, H), lambda b, j: (b, 0, 0)),           # x (all query rows)
            pl.BlockSpec((1, TJ, H), lambda b, j: (b, j, 0)),          # x (key tile)
            pl.BlockSpec((1, N, TJ, H), lambda b, j: (b, 0, j, 0)),    # e (key tile)
            pl.BlockSpec((1, 1, TJ), lambda b, j: (b, 0, j)),          # key-mask bias
            pl.BlockSpec((1, N, 1), lambda b, j: (b, 0, 0)),           # query mask
            pl.BlockSpec((H, D), lambda b, j: (0, 0)),                 # Wq
            pl.BlockSpec((H, DP + D), lambda b, j: (0, 0)),            # fused W_[v|k]
            pl.BlockSpec((H, D), lambda b, j: (0, 0)),                 # We
        ],
        out_specs=pl.BlockSpec((1, N, DP), lambda b, j: (b, 0, 0)),
        scratch_shapes=[
            pltpu.VMEM((N, D), jnp.float32),       # cached scaled query projection
            pltpu.VMEM((N, 1), jnp.float32),       # running max
            pltpu.VMEM((N, 1), jnp.float32),       # running denom
            pltpu.VMEM((N, DP), jnp.float32),      # output accumulator
        ],
    )
    out_padded = pl.pallas_call(
        _gtv1_attn_kernel,
        out_shape=jax.ShapeDtypeStruct((B, N, DP), jnp.float32),
        grid_spec=grid_spec,
        compiler_params=pltpu.CompilerParams(
            dimension_semantics=("parallel", "arbitrary"),
            vmem_limit_bytes=_vmem_limit_bytes(N, TJ, H, D, DP)),
    )(x_bf, x_bf, e_bf, k_bias, q_mask, wq_bf, w_vk, we_bf)
    return out_padded[:, :, :D]


def attention_head_gtv1_ref(x, e, node_mask, wq, wk, wv, we):
    """Pure-JAX reference mirroring the kernel's bf16-input / f32-accumulate compute."""
    cd, f32 = jnp.bfloat16, jnp.float32
    D = wq.shape[1]
    q = jnp.dot(x.astype(cd), wq.astype(cd), preferred_element_type=f32)
    k = jnp.dot(x.astype(cd), wk.astype(cd), preferred_element_type=f32)
    v = jnp.dot(x.astype(cd), wv.astype(cd), preferred_element_type=f32)
    e_proj = jnp.einsum("bijh,hd->bijd", e.astype(cd), we.astype(cd),
                        preferred_element_type=f32)
    scores = jnp.einsum("bid,bjd,bijd->bij", q, k, e_proj) / math.sqrt(D)
    scores = jnp.where(node_mask[:, None, :] > 0, scores, -1e9)
    attn = jax.nn.softmax(scores, axis=-1)
    out = jnp.einsum("bij,bjd->bid", attn.astype(cd).astype(f32),
                     v.astype(cd).astype(f32))
    return out * node_mask[:, :, None]


if __name__ == "__main__":
    # Shapes consistent with the module: hidden_dim=32, head_dim=16,
    # batch of 2 dense graphs with N=8 nodes; dense_attention=True, dropout=0.0.
    B, N, H, D = 2, 8, 32, 16

    key = jax.random.PRNGKey(0)
    kx, ke, kq, kk, kv, kwe = jax.random.split(key, 6)

    x = jax.random.normal(kx, (B, N, H), dtype=jnp.float32)
    e = jax.random.normal(ke, (B, N, N, H), dtype=jnp.float32)

    # node_mask: batch 0 fully valid, batch 1 has its last 3 nodes padded out.
    node_mask = jnp.ones((B, N), dtype=jnp.float32)
    node_mask = node_mask.at[1, 5:].set(0.0)

    # Deterministic nn.Linear-style init (uniform in +-1/sqrt(fan_in)), bias-free.
    bound = 1.0 / math.sqrt(H)
    wq = jax.random.uniform(kq, (H, D), jnp.float32, -bound, bound)
    wk = jax.random.uniform(kk, (H, D), jnp.float32, -bound, bound)
    wv = jax.random.uniform(kv, (H, D), jnp.float32, -bound, bound)
    we = jax.random.uniform(kwe, (H, D), jnp.float32, -bound, bound)

    out = attention_head_gtv1(x, e, node_mask, wq, wk, wv, we)
    out = jax.block_until_ready(out)

    ref = attention_head_gtv1_ref(x, e, node_mask, wq, wk, wv, we)
    assert out.shape == (B, N, D)
    err = float(jnp.max(jnp.abs(out - ref)))
    assert jnp.allclose(out, ref, atol=2e-2, rtol=2e-2), f"mismatch vs reference (max abs err {err})"

    # TODO(synk): the original GTv1 layer also clamps logits to [-5, 5] and returns
    # pre-softmax edge scores in some variants; the provided module's forward returns
    # a single tensor, so only the node-output path is implemented here.
    print("KERNEL_OK")
</pallas_src>

<mosaic_0001>
module attributes {stable_mosaic.version = 11 : i64} {
  func.func @_gtv1_attn_kernel(%arg0: i32, %arg1: i32, %arg2: memref<1x8x32xbf16, #tpu.memory_space<vmem>>, %arg3: memref<1x8x32xbf16, #tpu.memory_space<vmem>>, %arg4: memref<1x8x8x32xbf16, #tpu.memory_space<vmem>>, %arg5: memref<1x1x8xf32, #tpu.memory_space<vmem>>, %arg6: memref<1x8x1xf32, #tpu.memory_space<vmem>>, %arg7: memref<32x16xbf16, #tpu.memory_space<vmem>>, %arg8: memref<32x144xbf16, #tpu.memory_space<vmem>>, %arg9: memref<32x16xbf16, #tpu.memory_space<vmem>>, %arg10: memref<1x8x128xf32, #tpu.memory_space<vmem>>, %arg11: memref<8x16xf32, #tpu.memory_space<vmem>>, %arg12: memref<8x1xf32, #tpu.memory_space<vmem>>, %arg13: memref<8x1xf32, #tpu.memory_space<vmem>>, %arg14: memref<8x128xf32, #tpu.memory_space<vmem>>) attributes {dimension_semantics = [#tpu.dimension_semantics<parallel>, #tpu.dimension_semantics<arbitrary>], iteration_bounds = array<i64: 2, 1>, scalar_prefetch = 0 : i64, scratch_operands = 4 : i64, tpu.core_type = #tpu.core_type<tc>, window_params = [{transform_indices = @transform_0, window_bounds = array<i64: 1, 8, 32>}, {transform_indices = @transform_1, window_bounds = array<i64: 1, 8, 32>}, {transform_indices = @transform_2, window_bounds = array<i64: 1, 8, 8, 32>}, {transform_indices = @transform_3, window_bounds = array<i64: 1, 1, 8>}, {transform_indices = @transform_4, window_bounds = array<i64: 1, 8, 1>}, {pipeline_mode = #tpu.pipeline_mode<synchronous>, transform_indices = @transform_5, window_bounds = array<i64: 32, 16>}, {pipeline_mode = #tpu.pipeline_mode<synchronous>, transform_indices = @transform_6, window_bounds = array<i64: 32, 144>}, {pipeline_mode = #tpu.pipeline_mode<synchronous>, transform_indices = @transform_7, window_bounds = array<i64: 32, 16>}, {transform_indices = @transform_8, window_bounds = array<i64: 1, 8, 128>}]} {
    %c0_i32 = arith.constant 0 : i32
    %0 = arith.cmpi eq, %arg1, %c0_i32 : i32
    %1 = arith.extui %0 : i1 to i32
    %c0_i32_0 = arith.constant 0 : i32
    %2 = arith.cmpi ne, %1, %c0_i32_0 : i32
    scf.if %2 {
      %cst_35 = arith.constant 0xFF800000 : f32
      %53 = vector.broadcast %cst_35 : f32 to vector<8x1xf32>
      %c0_36 = arith.constant 0 : index
      %c0_37 = arith.constant 0 : index
      %54 = vector.load %arg12[%c0_36, %c0_37] : memref<8x1xf32, #tpu.memory_space<vmem>>, vector<8x1xf32>
      tpu.vector_store %arg12[%c0_36, %c0_37], %53 {strides = array<i32>} : memref<8x1xf32, #tpu.memory_space<vmem>>, vector<8x1xf32>,
      %cst_38 = arith.constant 0.000000e+00 : f32
      %55 = vector.broadcast %cst_38 : f32 to vector<8x1xf32>
      %c0_39 = arith.constant 0 : index
      %c0_40 = arith.constant 0 : index
      %56 = vector.load %arg13[%c0_39, %c0_40] : memref<8x1xf32, #tpu.memory_space<vmem>>, vector<8x1xf32>
      tpu.vector_store %arg13[%c0_39, %c0_40], %55 {strides = array<i32>} : memref<8x1xf32, #tpu.memory_space<vmem>>, vector<8x1xf32>,
      %cst_41 = arith.constant 0.000000e+00 : f32
      %57 = vector.broadcast %cst_41 : f32 to vector<8x128xf32>
      %c0_42 = arith.constant 0 : index
      %c0_43 = arith.constant 0 : index
      %58 = vector.load %arg14[%c0_42, %c0_43] : memref<8x128xf32, #tpu.memory_space<vmem>>, vector<8x128xf32>
      tpu.vector_store %arg14[%c0_42, %c0_43], %57 {strides = array<i32>} : memref<8x128xf32, #tpu.memory_space<vmem>>, vector<8x128xf32>,
      %c0_44 = arith.constant 0 : index
      %c0_45 = arith.constant 0 : index
      %c0_46 = arith.constant 0 : index
      %59 = vector.load %arg2[%c0_44, %c0_45, %c0_46] : memref<1x8x32xbf16, #tpu.memory_space<vmem>>, vector<1x8x32xbf16>
      %60 = vector.shape_cast %59 : vector<1x8x32xbf16> to vector<8x32xbf16>
      %c0_47 = arith.constant 0 : index
      %c0_48 = arith.constant 0 : index
      %61 = vector.load %arg7[%c0_47, %c0_48] : memref<32x16xbf16, #tpu.memory_space<vmem>>, vector<32x16xbf16>
      %cst_49 = arith.constant dense<0.000000e+00> : vector<8x16xf32>
      %62 = tpu.matmul %60, %61, %cst_49 {dimension_numbers = #tpu.dot_dimension_numbers<[1], [0], [0], [1], [0, 0, 1, 1], [], []>} : vector<8x32xbf16>, vector<32x16xbf16>, vector<8x16xf32> -> vector<8x16xf32>
      %cst_50 = arith.constant 2.500000e-01 : f32
      %63 = vector.broadcast %cst_50 : f32 to vector<8x16xf32>
      %64 = arith.mulf %62, %63 : vector<8x16xf32>
      %c0_51 = arith.constant 0 : index
      %c0_52 = arith.constant 0 : index
      %65 = vector.load %arg11[%c0_51, %c0_52] : memref<8x16xf32, #tpu.memory_space<vmem>>, vector<8x16xf32>
      tpu.vector_store %arg11[%c0_51, %c0_52], %64 {strides = array<i32>} : memref<8x16xf32, #tpu.memory_space<vmem>>, vector<8x16xf32>,
    } else {
    }
    %c0 = arith.constant 0 : index
    %c0_1 = arith.constant 0 : index
    %c0_2 = arith.constant 0 : index
    %3 = vector.load %arg3[%c0, %c0_1, %c0_2] : memref<1x8x32xbf16, #tpu.memory_space<vmem>>, vector<1x8x32xbf16>
    %4 = vector.shape_cast %3 : vector<1x8x32xbf16> to vector<8x32xbf16>
    %c0_3 = arith.constant 0 : index
    %c0_4 = arith.constant 0 : index
    %5 = vector.load %arg8[%c0_3, %c0_4] : memref<32x144xbf16, #tpu.memory_space<vmem>>, vector<32x144xbf16>
    %cst = arith.constant dense<0.000000e+00> : vector<8x144xf32>
    %6 = tpu.matmul %4, %5, %cst {dimension_numbers = #tpu.dot_dimension_numbers<[1], [0], [0], [1], [0, 0, 1, 1], [], []>} : vector<8x32xbf16>, vector<32x144xbf16>, vector<8x144xf32> -> vector<8x144xf32>
    %7 = vector.extract_strided_slice %6 {offsets = [0, 0], sizes = [8, 128], strides = [1, 1]} : vector<8x144xf32> to vector<8x128xf32>
    %8 = arith.truncf %7 : vector<8x128xf32> to vector<8x128xbf16>
    %9 = vector.extract_strided_slice %6 {offsets = [0, 128], sizes = [8, 16], strides = [1, 1]} : vector<8x144xf32> to vector<8x16xf32>
    %c0_5 = arith.constant 0 : index
    %c0_6 = arith.constant 0 : index
    %c0_7 = arith.constant 0 : index
    %c0_8 = arith.constant 0 : index
    %10 = vector.load %arg4[%c0_5, %c0_6, %c0_7, %c0_8] : memref<1x8x8x32xbf16, #tpu.memory_space<vmem>>, vector<1x8x8x32xbf16>
    %11 = vector.shape_cast %10 : vector<1x8x8x32xbf16> to vector<8x8x32xbf16>
    %12 = vector.shape_cast %11 : vector<8x8x32xbf16> to vector<64x32xbf16>
    %c0_9 = arith.constant 0 : index
    %c0_10 = arith.constant 0 : index
    %13 = vector.load %arg9[%c0_9, %c0_10] : memref<32x16xbf16, #tpu.memory_space<vmem>>, vector<32x16xbf16>
    %cst_11 = arith.constant dense<0.000000e+00> : vector<64x16xf32>
    %14 = tpu.matmul %12, %13, %cst_11 {dimension_numbers = #tpu.dot_dimension_numbers<[1], [0], [0], [1], [0, 0, 1, 1], [], []>} : vector<64x32xbf16>, vector<32x16xbf16>, vector<64x16xf32> -> vector<64x16xf32>
    %15 = vector.shape_cast %14 : vector<64x16xf32> to vector<8x8x16xf32>
    %16 = vector.shape_cast %9 : vector<8x16xf32> to vector<1x8x16xf32>
    %17 = vector.broadcast %16 : vector<1x8x16xf32> to vector<8x8x16xf32>
    %18 = arith.mulf %15, %17 : vector<8x8x16xf32>
    %c0_12 = arith.constant 0 : index
    %c0_13 = arith.constant 0 : index
    %19 = vector.load %arg11[%c0_12, %c0_13] : memref<8x16xf32, #tpu.memory_space<vmem>>, vector<8x16xf32>
    %20 = vector.shape_cast %19 : vector<8x16xf32> to vector<8x1x16xf32>
    %cst_14 = arith.constant dense<0.000000e+00> : vector<8x1x8xf32>
    %21 = tpu.matmul %20, %18, %cst_14 {dimension_numbers = #tpu.dot_dimension_numbers<[2], [2], [1], [1], [0, 0, 0, 1, 1, 1], [0], [0]>} : vector<8x1x16xf32>, vector<8x8x16xf32>, vector<8x1x8xf32> -> vector<8x1x8xf32>
    %22 = vector.shape_cast %21 : vector<8x1x8xf32> to vector<8x8xf32>
    %c0_15 = arith.constant 0 : index
    %c0_16 = arith.constant 0 : index
    %c0_17 = arith.constant 0 : index
    %23 = vector.load %arg5[%c0_15, %c0_16, %c0_17] : memref<1x1x8xf32, #tpu.memory_space<vmem>>, vector<1x1x8xf32>
    %24 = vector.shape_cast %23 : vector<1x1x8xf32> to vector<1x8xf32>
    %25 = vector.broadcast %24 : vector<1x8xf32> to vector<8x8xf32>
    %26 = arith.addf %22, %25 : vector<8x8xf32>
    %c0_18 = arith.constant 0 : index
    %c0_19 = arith.constant 0 : index
    %27 = vector.load %arg12[%c0_18, %c0_19] : memref<8x1xf32, #tpu.memory_space<vmem>>, vector<8x1xf32>
    %cst_20 = arith.constant dense<0xFF800000> : vector<8xf32>
    %28 = vector.multi_reduction <maximumf>, %26, %cst_20 [1] : vector<8x8xf32> to vector<8xf32>
    %29 = vector.shape_cast %28 : vector<8xf32> to vector<8x1xf32>
    %30 = arith.maximumf %27, %29 : vector<8x1xf32>
    %31 = arith.subf %27, %30 : vector<8x1xf32>
    %32 = math.exp %31 : vector<8x1xf32>
    %33 = vector.broadcast %30 : vector<8x1xf32> to vector<8x8xf32>
    %34 = arith.subf %26, %33 : vector<8x8xf32>
    %35 = math.exp %34 : vector<8x8xf32>
    %c0_21 = arith.constant 0 : index
    %c0_22 = arith.constant 0 : index
    %36 = vector.load %arg13[%c0_21, %c0_22] : memref<8x1xf32, #tpu.memory_space<vmem>>, vector<8x1xf32>
    %37 = arith.mulf %32, %36 : vector<8x1xf32>
    %cst_23 = arith.constant dense<0.000000e+00> : vector<8xf32>
    %38 = vector.multi_reduction <add>, %35, %cst_23 [1] : vector<8x8xf32> to vector<8xf32>
    %39 = vector.shape_cast %38 : vector<8xf32> to vector<8x1xf32>
    %40 = arith.addf %37, %39 : vector<8x1xf32>
    %c0_24 = arith.constant 0 : index
    %c0_25 = arith.constant 0 : index
    %41 = vector.load %arg13[%c0_24, %c0_25] : memref<8x1xf32, #tpu.memory_space<vmem>>, vector<8x1xf32>
    tpu.vector_store %arg13[%c0_24, %c0_25], %40 {strides = array<i32>} : memref<8x1xf32, #tpu.memory_space<vmem>>, vector<8x1xf32>,
    %c0_26 = arith.constant 0 : index
    %c0_27 = arith.constant 0 : index
    %42 = vector.load %arg14[%c0_26, %c0_27] : memref<8x128xf32, #tpu.memory_space<vmem>>, vector<8x128xf32>
    %43 = vector.broadcast %32 : vector<8x1xf32> to vector<8x128xf32>
    %44 = arith.mulf %43, %42 : vector<8x128xf32>
    %45 = arith.truncf %35 : vector<8x8xf32> to vector<8x8xbf16>
    %cst_28 = arith.constant dense<0.000000e+00> : vector<8x128xf32>
    %46 = tpu.matmul %45, %8, %cst_28 {dimension_numbers = #tpu.dot_dimension_numbers<[1], [0], [0], [1], [0, 0, 1, 1], [], []>} : vector<8x8xbf16>, vector<8x128xbf16>, vector<8x128xf32> -> vector<8x128xf32>
    %47 = arith.addf %44, %46 : vector<8x128xf32>
    %c0_29 = arith.constant 0 : index
    %c0_30 = arith.constant 0 : index
    %48 = vector.load %arg14[%c0_29, %c0_30] : memref<8x128xf32, #tpu.memory_space<vmem>>, vector<8x128xf32>
    tpu.vector_store %arg14[%c0_29, %c0_30], %47 {strides = array<i32>} : memref<8x128xf32, #tpu.memory_space<vmem>>, vector<8x128xf32>,
    %c0_31 = arith.constant 0 : index
    %c0_32 = arith.constant 0 : index
    %49 = vector.load %arg12[%c0_31, %c0_32] : memref<8x1xf32, #tpu.memory_space<vmem>>, vector<8x1xf32>
    tpu.vector_store %arg12[%c0_31, %c0_32], %30 {strides = array<i32>} : memref<8x1xf32, #tpu.memory_space<vmem>>, vector<8x1xf32>,
    %c0_i32_33 = arith.constant 0 : i32
    %50 = arith.cmpi eq, %arg1, %c0_i32_33 : i32
    %51 = arith.extui %50 : i1 to i32
    %c0_i32_34 = arith.constant 0 : i32
    %52 = arith.cmpi ne, %51, %c0_i32_34 : i32
    scf.if %52 {
      %c0_35 = arith.constant 0 : index
      %c0_36 = arith.constant 0 : index
      %53 = vector.load %arg13[%c0_35, %c0_36] : memref<8x1xf32, #tpu.memory_space<vmem>>, vector<8x1xf32>
      %54 = tpu.reciprocal %53 {approx = true} : vector<8x1xf32> -> vector<8x1xf32>
      %c0_37 = arith.constant 0 : index
      %c0_38 = arith.constant 0 : index
      %55 = vector.load %arg14[%c0_37, %c0_38] : memref<8x128xf32, #tpu.memory_space<vmem>>, vector<8x128xf32>
      %56 = vector.broadcast %54 : vector<8x1xf32> to vector<8x128xf32>
      %57 = arith.mulf %55, %56 : vector<8x128xf32>
      %c0_39 = arith.constant 0 : index
      %c0_40 = arith.constant 0 : index
      %c0_41 = arith.constant 0 : index
      %58 = vector.load %arg6[%c0_39, %c0_40, %c0_41] : memref<1x8x1xf32, #tpu.memory_space<vmem>>, vector<1x8x1xf32>
      %59 = vector.shape_cast %58 : vector<1x8x1xf32> to vector<8x1xf32>
      %60 = vector.broadcast %59 : vector<8x1xf32> to vector<8x128xf32>
      %61 = arith.mulf %57, %60 : vector<8x128xf32>
      %c0_42 = arith.constant 0 : index
      %c0_43 = arith.constant 0 : index
      %c0_44 = arith.constant 0 : index
      %62 = vector.load %arg10[%c0_42, %c0_43, %c0_44] : memref<1x8x128xf32, #tpu.memory_space<vmem>>, vector<1x8x128xf32>
      %63 = vector.shape_cast %62 : vector<1x8x128xf32> to vector<8x128xf32>
      %64 = vector.shape_cast %61 : vector<8x128xf32> to vector<1x8x128xf32>
      tpu.vector_store %arg10[%c0_42, %c0_43, %c0_44], %64 {strides = array<i32>} : memref<1x8x128xf32, #tpu.memory_space<vmem>>, vector<1x8x128xf32>,
    } else {
    }
    return
  }
  func.func @transform_0(%arg0: i32, %arg1: i32) -> (i32, i32, i32) {
    %c0_i32 = arith.constant 0 : i32
    %c0_i32_0 = arith.constant 0 : i32
    %c0_i32_1 = arith.constant 0 : i32
    return %arg0, %c0_i32, %c0_i32_0 : i32, i32, i32
  }
  func.func @transform_1(%arg0: i32, %arg1: i32) -> (i32, i32, i32) {
    %c0_i32 = arith.constant 0 : i32
    %c0_i32_0 = arith.constant 0 : i32
    return %arg0, %arg1, %c0_i32 : i32, i32, i32
  }
  func.func @transform_2(%arg0: i32, %arg1: i32) -> (i32, i32, i32, i32) {
    %c0_i32 = arith.constant 0 : i32
    %c0_i32_0 = arith.constant 0 : i32
    %c0_i32_1 = arith.constant 0 : i32
    return %arg0, %c0_i32, %arg1, %c0_i32_0 : i32, i32, i32, i32
  }
  func.func @transform_3(%arg0: i32, %arg1: i32) -> (i32, i32, i32) {
    %c0_i32 = arith.constant 0 : i32
    %c0_i32_0 = arith.constant 0 : i32
    return %arg0, %c0_i32, %arg1 : i32, i32, i32
  }
  func.func @transform_4(%arg0: i32, %arg1: i32) -> (i32, i32, i32) {
    %c0_i32 = arith.constant 0 : i32
    %c0_i32_0 = arith.constant 0 : i32
    %c0_i32_1 = arith.constant 0 : i32
    return %arg0, %c0_i32, %c0_i32_0 : i32, i32, i32
  }
  func.func @transform_5(%arg0: i32, %arg1: i32) -> (i32, i32) {
    %c0_i32 = arith.constant 0 : i32
    %c0_i32_0 = arith.constant 0 : i32
    %c0_i32_1 = arith.constant 0 : i32
    return %c0_i32, %c0_i32_0 : i32, i32
  }
  func.func @transform_6(%arg0: i32, %arg1: i32) -> (i32, i32) {
    %c0_i32 = arith.constant 0 : i32
    %c0_i32_0 = arith.constant 0 : i32
    %c0_i32_1 = arith.constant 0 : i32
    return %c0_i32, %c0_i32_0 : i32, i32
  }
  func.func @transform_7(%arg0: i32, %arg1: i32) -> (i32, i32) {
    %c0_i32 = arith.constant 0 : i32
    %c0_i32_0 = arith.constant 0 : i32
    %c0_i32_1 = arith.constant 0 : i32
    return %c0_i32, %c0_i32_0 : i32, i32
  }
  func.func @transform_8(%arg0: i32, %arg1: i32) -> (i32, i32, i32) {
    %c0_i32 = arith.constant 0 : i32
    %c0_i32_0 = arith.constant 0 : i32
    %c0_i32_1 = arith.constant 0 : i32
    return %arg0, %c0_i32, %c0_i32_0 : i32, i32, i32
  }
}

</mosaic_0001>

<llo_original>
// kernel: tpu_custom_call.1
$region0: #{tpu_custom_call.1}
  #allocation0 [shape = 'u32[]', space=smem, size = 0x4, offset = 0x4, fixed_abs, tag = 'smem constant byte address 0x4 - core index']
  #allocation1 [shape = 'u32[144,128]{1,0:T(1,128)}', space=vmem, size = 0x12000, scoped, tag = 'internal scratch']
  #allocation2 [shape = 'f32[8,16]{1,0:T(8,128)}', space=vmem, size = 0x1000, scoped, tag = 'scratch operand']
  #allocation3 [shape = 'f32[8,1]{1,0:T(8,128)}', space=vmem, size = 0x1000, scoped, tag = 'scratch operand']
  #allocation4 [shape = 'f32[8,1]{1,0:T(8,128)}', space=vmem, size = 0x1000, scoped, tag = 'scratch operand']
  #allocation5 [shape = 'f32[8,128]{1,0:T(8,128)}', space=vmem, size = 0x1000, scoped, tag = 'scratch operand']
  %s0 = inlined_call_operand.hbm [shape: bf16[2,8,32], index: 0, kind: input, shape index: {}]
  %s1 = inlined_call_operand.hbm [shape: bf16[2,8,32], index: 1, kind: input, shape index: {}]
  %s2 = inlined_call_operand.vmem [shape: bf16[2,8,8,32], index: 2, kind: input, shape index: {}]
  %s3 = inlined_call_operand.hbm [shape: f32[2,1,8], index: 3, kind: input, shape index: {}]
  %s4 = inlined_call_operand.vmem [shape: f32[2,8,1], index: 4, kind: input, shape index: {}]
  %s5 = inlined_call_operand.vmem [shape: bf16[32,16], index: 5, kind: input, shape index: {}]
  %s6 = inlined_call_operand.hbm [shape: bf16[32,144], index: 6, kind: input, shape index: {}]
  %s7 = inlined_call_operand.vmem [shape: bf16[32,16], index: 7, kind: input, shape index: {}]
  %s8 = inlined_call_operand.hbm [shape: f32[2,8,128], index: 8, kind: output, shape index: {}]
  %s9 = sld [smem:[#allocation0]]
  $region89: #{tpu_custom_call.1} parent=0
    _
  %s11 = ssub.s32 1, %s9
  %s12 = scalar_select 0, %s11, %s9
  $region1: #{tpu_custom_call.1} parent=0
    #allocation6 [shape = 'u8[4096]{0}', space=vmem, size = 0x1000, scoped, tag = 'input window, operand 0']
    #allocation7 [shape = 's32[2]{0}', space=sflag, size = 0x8, scoped, tag = 'scoped memory for tpu_custom_call.1']
    #allocation8 [shape = 's32[2]{0}', space=sflag, size = 0x8, scoped, tag = 'scoped memory for tpu_custom_call.1']
    #allocation9 [shape = 'u8[4096]{0}', space=vmem, size = 0x1000, scoped, tag = 'input window, operand 1']
    #allocation10 [shape = 's32[2]{0}', space=sflag, size = 0x8, scoped, tag = 'scoped memory for tpu_custom_call.1']
    #allocation11 [shape = 'u8[1024]{0}', space=vmem, size = 0x400, scoped, tag = 'input window, operand 3']
    #allocation12 [shape = 'u8[16384]{0}', space=vmem, size = 0x4000, scoped, tag = 'input window, operand 6, single buffered']
    #allocation13 [shape = 's32[1]{0}', space=sflag, size = 0x4, scoped, tag = 'scoped memory for tpu_custom_call.1']
    #allocation14 [shape = 'u8[8192]{0}', space=vmem, size = 0x2000, scoped, tag = 'output window, operand 0']
    %13 = vsyncpa [#allocation7], 0
    %s14 = scalar_lea.sflag [#allocation7], 1
    %15 = vsyncpa %s14, 0
    %16 = vsyncpa [#allocation10], 0
    %s17 = scalar_lea.sflag [#allocation10], 1
    %18 = vsyncpa %s17, 0
    %19 = vsyncpa [#allocation13], 0
    %20 = vsyncpa [#allocation8], 0
    %s21 = scalar_lea.sflag [#allocation8], 1
    %22 = vsyncpa %s21, 0
    loop: start=0, step=1, limit=4
    $region2: #{tpu_custom_call.1} parent=1 // loop_pre_header
      _
    $region3: #{tpu_custom_call.1} parent=1 // loop_header
      %s24 = sphi 0, %s28
      %p25 = scmp.ge.s32.totalorder %s24, 4
      %s31 = sphi 0, %s43
      %s32 = sphi 0, %s39
      %s33 = sphi 0, %s31
      %s34 = sphi 0, %s32
      %s35 = sphi 0, %s33
      %s36 = sphi 0, %s34
      %s46 = sphi 0, %s48
      %s49 = sphi 0, %s46
      %s50 = sphi 0, %s49
      %s66 = sphi 0, %s50
      %s74 = sphi 0, %s76
      %s77 = sphi 0, %s74
      %s78 = sphi 0, %s77
      %s94 = sphi 0, %s78
      %s102 = sphi 0, %s104
      %s105 = sphi 0, %s102
      %s106 = sphi 0, %s105
      %s122 = sphi 0, %s106
      %s130 = sphi 0, %s132
      %s133 = sphi 0, %s130
      %s134 = sphi 0, %s133
      %s150 = sphi 0, %s134
      %s156 = sphi 0, %s158
      %s159 = sphi 0, %s156
      %s160 = sphi 0, %s159
      %s176 = sphi 0, %s160
      %s180 = sphi 0, %s180
      %s182 = sphi 0, %s180
      %s183 = sphi 0, %s182
      %s197 = sphi 0, %s183
      %s201 = sphi 0, %s201
      %s203 = sphi 0, %s201
      %s204 = sphi 0, %s203
      %s218 = sphi 0, %s204
      %s222 = sphi 0, %s222
      %s224 = sphi 0, %s222
      %s225 = sphi 0, %s224
      %s239 = sphi 0, %s225
      %s245 = sphi 0, %s247
      %s248 = sphi 0, %s245
      %s249 = sphi 0, %s248
      %s265 = sphi 0, %s249
    $region4: #{tpu_custom_call.1} parent=1 // loop_header_branch
      %27 = sbr.rel (%p25) target = $region8
    $region5: #{tpu_custom_call.1} parent=1 // loop_body
      %s29 = ssub.s32 %s24, 1
      %s30 = ssub.s32 %s24, 2
      %s37 = sadd.s32 1, %s32
      %p38 = scmp.ge.s32.totalorder %s37, 1
      %s39 = scalar_select %p38, 0, %s37
      %s40 = sadd.s32 1, %s31
      %s41 = scalar_select %p38, %s40, %s31
      %p42 = scmp.ge.s32.totalorder %s41, 2
      %s43 = scalar_select %p42, 0, %s41
      %s44 = ssub.s32 %s31, %s43
      %p45 = scmp.eq.s32.totalorder %s44, 0
      %s47 = sadd.s32 %s46, 1
      %s48 = scalar_select %p45, %s46, %s47
      %p51 = pneg %p45
      %p52 = scmp.eq.s32.totalorder %s24, 1
      %p53 = por %p51, %p52
      %p54 = scmp.ne.s32.totalorder %s46, %s49
      %p55 = scmp.eq.s32.totalorder %s24, 0
      %p56 = por %p54, %p55
      %p57 = scmp.ne.s32.totalorder %s46, %s49
      %p58 = scmp.eq.s32.totalorder %s29, 1
      %p59 = por %p57, %p58
      %p60 = scmp.ne.s32.totalorder %s49, %s50
      %p61 = scmp.eq.s32.totalorder %s29, 0
      %p62 = por %p60, %p61
      %p63 = scmp.ne.s32.totalorder %s49, %s50
      %p64 = scmp.eq.s32.totalorder %s30, 1
      %p65 = por %p63, %p64
      %p67 = scmp.ne.s32.totalorder %s50, %s66
      %p68 = scmp.eq.s32.totalorder %s30, 0
      %p69 = por %p67, %p68
      %s70 = ssub.s32 %s31, %s43
      %s71 = ssub.s32 %s32, %s39
      %s72 = sor.u32 %s70, %s71
      %p73 = scmp.eq.s32.totalorder %s72, 0
      %s75 = sadd.s32 %s74, 1
      %s76 = scalar_select %p73, %s74, %s75
      %p79 = pneg %p73
      %p80 = scmp.eq.s32.totalorder %s24, 1
      %p81 = por %p79, %p80
      %p82 = scmp.ne.s32.totalorder %s74, %s77
      %p83 = scmp.eq.s32.totalorder %s24, 0
      %p84 = por %p82, %p83
      %p85 = scmp.ne.s32.totalorder %s74, %s77
      %p86 = scmp.eq.s32.totalorder %s29, 1
      %p87 = por %p85, %p86
      %p88 = scmp.ne.s32.totalorder %s77, %s78
      %p89 = scmp.eq.s32.totalorder %s29, 0
      %p90 = por %p88, %p89
      %p91 = scmp.ne.s32.totalorder %s77, %s78
      %p92 = scmp.eq.s32.totalorder %s30, 1
      %p93 = por %p91, %p92
      %p95 = scmp.ne.s32.totalorder %s78, %s94
      %p96 = scmp.eq.s32.totalorder %s30, 0
      %p97 = por %p95, %p96
      %s98 = ssub.s32 %s31, %s43
      %s99 = ssub.s32 %s32, %s39
      %s100 = sor.u32 %s98, %s99
      %p101 = scmp.eq.s32.totalorder %s100, 0
      %s103 = sadd.s32 %s102, 1
      %s104 = scalar_select %p101, %s102, %s103
      %p107 = pneg %p101
      %p108 = scmp.eq.s32.totalorder %s24, 1
      %p109 = por %p107, %p108
      %p110 = scmp.ne.s32.totalorder %s102, %s105
      %p111 = scmp.eq.s32.totalorder %s24, 0
      %p112 = por %p110, %p111
      %p113 = scmp.ne.s32.totalorder %s102, %s105
      %p114 = scmp.eq.s32.totalorder %s29, 1
      %p115 = por %p113, %p114
      %p116 = scmp.ne.s32.totalorder %s105, %s106
      %p117 = scmp.eq.s32.totalorder %s29, 0
      %p118 = por %p116, %p117
      %p119 = scmp.ne.s32.totalorder %s105, %s106
      %p120 = scmp.eq.s32.totalorder %s30, 1
      %p121 = por %p119, %p120
      %p123 = scmp.ne.s32.totalorder %s106, %s122
      %p124 = scmp.eq.s32.totalorder %s30, 0
      %p125 = por %p123, %p124
      %s126 = ssub.s32 %s31, %s43
      %s127 = ssub.s32 %s32, %s39
      %s128 = sor.u32 %s126, %s127
      %p129 = scmp.eq.s32.totalorder %s128, 0
      %s131 = sadd.s32 %s130, 1
      %s132 = scalar_select %p129, %s130, %s131
      %p135 = pneg %p129
      %p136 = scmp.eq.s32.totalorder %s24, 1
      %p137 = por %p135, %p136
      %p138 = scmp.ne.s32.totalorder %s130, %s133
      %p139 = scmp.eq.s32.totalorder %s24, 0
      %p140 = por %p138, %p139
      %p141 = scmp.ne.s32.totalorder %s130, %s133
      %p142 = scmp.eq.s32.totalorder %s29, 1
      %p143 = por %p141, %p142
      %p144 = scmp.ne.s32.totalorder %s133, %s134
      %p145 = scmp.eq.s32.totalorder %s29, 0
      %p146 = por %p144, %p145
      %p147 = scmp.ne.s32.totalorder %s133, %s134
      %p148 = scmp.eq.s32.totalorder %s30, 1
      %p149 = por %p147, %p148
      %p151 = scmp.ne.s32.totalorder %s134, %s150
      %p152 = scmp.eq.s32.totalorder %s30, 0
      %p153 = por %p151, %p152
      %s154 = ssub.s32 %s31, %s43
      %p155 = scmp.eq.s32.totalorder %s154, 0
      %s157 = sadd.s32 %s156, 1
      %s158 = scalar_select %p155, %s156, %s157
      %p161 = pneg %p155
      %p162 = scmp.eq.s32.totalorder %s24, 1
      %p163 = por %p161, %p162
      %p164 = scmp.ne.s32.totalorder %s156, %s159
      %p165 = scmp.eq.s32.totalorder %s24, 0
      %p166 = por %p164, %p165
      %p167 = scmp.ne.s32.totalorder %s156, %s159
      %p168 = scmp.eq.s32.totalorder %s29, 1
      %p169 = por %p167, %p168
      %p170 = scmp.ne.s32.totalorder %s159, %s160
      %p171 = scmp.eq.s32.totalorder %s29, 0
      %p172 = por %p170, %p171
      %p173 = scmp.ne.s32.totalorder %s159, %s160
      %p174 = scmp.eq.s32.totalorder %s30, 1
      %p175 = por %p173, %p174
      %p177 = scmp.ne.s32.totalorder %s160, %s176
      %p178 = scmp.eq.s32.totalorder %s30, 0
      %p179 = por %p177, %p178
      %s181 = sadd.s32 %s180, 1
      %p184 = scmp.eq.s32.totalorder %s24, 1
      %p185 = scmp.ne.s32.totalorder %s180, %s182
      %p186 = scmp.eq.s32.totalorder %s24, 0
      %p187 = por %p185, %p186
      %p188 = scmp.ne.s32.totalorder %s180, %s182
      %p189 = scmp.eq.s32.totalorder %s29, 1
      %p190 = por %p188, %p189
      %p191 = scmp.ne.s32.totalorder %s182, %s183
      %p192 = scmp.eq.s32.totalorder %s29, 0
      %p193 = por %p191, %p192
      %p194 = scmp.ne.s32.totalorder %s182, %s183
      %p195 = scmp.eq.s32.totalorder %s30, 1
      %p196 = por %p194, %p195
      %p198 = scmp.ne.s32.totalorder %s183, %s197
      %p199 = scmp.eq.s32.totalorder %s30, 0
      %p200 = por %p198, %p199
      %s202 = sadd.s32 %s201, 1
      %p205 = scmp.eq.s32.totalorder %s24, 1
      %p206 = scmp.ne.s32.totalorder %s201, %s203
      %p207 = scmp.eq.s32.totalorder %s24, 0
      %p208 = por %p206, %p207
      %p209 = scmp.ne.s32.totalorder %s201, %s203
      %p210 = scmp.eq.s32.totalorder %s29, 1
      %p211 = por %p209, %p210
      %p212 = scmp.ne.s32.totalorder %s203, %s204
      %p213 = scmp.eq.s32.totalorder %s29, 0
      %p214 = por %p212, %p213
      %p215 = scmp.ne.s32.totalorder %s203, %s204
      %p216 = scmp.eq.s32.totalorder %s30, 1
      %p217 = por %p215, %p216
      %p219 = scmp.ne.s32.totalorder %s204, %s218
      %p220 = scmp.eq.s32.totalorder %s30, 0
      %p221 = por %p219, %p220
      %s223 = sadd.s32 %s222, 1
      %p226 = scmp.eq.s32.totalorder %s24, 1
      %p227 = scmp.ne.s32.totalorder %s222, %s224
      %p228 = scmp.eq.s32.totalorder %s24, 0
      %p229 = por %p227, %p228
      %p230 = scmp.ne.s32.totalorder %s222, %s224
      %p231 = scmp.eq.s32.totalorder %s29, 1
      %p232 = por %p230, %p231
      %p233 = scmp.ne.s32.totalorder %s224, %s225
      %p234 = scmp.eq.s32.totalorder %s29, 0
      %p235 = por %p233, %p234
      %p236 = scmp.ne.s32.totalorder %s224, %s225
      %p237 = scmp.eq.s32.totalorder %s30, 1
      %p238 = por %p236, %p237
      %p240 = scmp.ne.s32.totalorder %s225, %s239
      %p241 = scmp.eq.s32.totalorder %s30, 0
      %p242 = por %p240, %p241
      %s243 = ssub.s32 %s31, %s43
      %p244 = scmp.eq.s32.totalorder %s243, 0
      %s246 = sadd.s32 %s245, 1
      %s247 = scalar_select %p244, %s245, %s246
      %p250 = pneg %p244
      %p251 = scmp.eq.s32.totalorder %s24, 1
      %p252 = por %p250, %p251
      %p253 = scmp.ne.s32.totalorder %s245, %s248
      %p254 = scmp.eq.s32.totalorder %s24, 0
      %p255 = por %p253, %p254
      %p256 = scmp.ne.s32.totalorder %s245, %s248
      %p257 = scmp.eq.s32.totalorder %s29, 1
      %p258 = por %p256, %p257
      %p259 = scmp.ne.s32.totalorder %s248, %s249
      %p260 = scmp.eq.s32.totalorder %s29, 0
      %p261 = por %p259, %p260
      %p262 = scmp.ne.s32.totalorder %s248, %s249
      %p263 = scmp.eq.s32.totalorder %s30, 1
      %p264 = por %p262, %p263
      %p266 = scmp.ne.s32.totalorder %s249, %s265
      %p267 = scmp.eq.s32.totalorder %s30, 0
      %p268 = por %p266, %p267
      %p269 = scmp.le.s32.totalorder 1, %s24
      %p270 = scmp.lt.s32.totalorder %s24, 3
      %p271 = pnand %p269, %p270
      %p272 = pneg %p271
      // Predicated region
      $region9: #{tpu_custom_call.1} parent=5 // pred_check
        _
      $region10: #{tpu_custom_call.1} parent=5 // pred_check_branch
        %274 = sbr.rel (%p271) target = $region12
      $region11: #{tpu_custom_call.1} parent=5 // pred_region
        %s275 = ssub.s32 %s24, 1
        // Predicated region
        $region13: #{tpu_custom_call.1} parent=11 // pred_check
          %p276 = pneg %p193
        $region14: #{tpu_custom_call.1} parent=11 // pred_check_branch
          %278 = sbr.rel (%p276) target = $region16
        $region15: #{tpu_custom_call.1} parent=11 // pred_region
          _
        $region16: #{tpu_custom_call.1} parent=11 // pred_fallthru
          _
        // Predicated region
        $region17: #{tpu_custom_call.1} parent=11 // pred_check
          %p279 = pneg %p214
        $region18: #{tpu_custom_call.1} parent=11 // pred_check_branch
          %281 = sbr.rel (%p279) target = $region20
        $region19: #{tpu_custom_call.1} parent=11 // pred_region
          %s283 = ssub.s32 512, 512
          %284 = vsyncadd [#allocation13], %s283
          %s285 = sshll.u32 [#allocation12], 4
          %s286 = int_to_ptr.vmem [resolvable:$true] %s285
          %291 = dma.hbm_to_vmem [thread:$0]  %s6, 512, %s286, [#allocation13], 128, 128, 8
        $region20: #{tpu_custom_call.1} parent=11 // pred_fallthru
          _
        // Predicated region
        $region21: #{tpu_custom_call.1} parent=11 // pred_check
          %p292 = pneg %p235
        $region22: #{tpu_custom_call.1} parent=11 // pred_check_branch
          %294 = sbr.rel (%p292) target = $region24
        $region23: #{tpu_custom_call.1} parent=11 // pred_region
          _
        $region24: #{tpu_custom_call.1} parent=11 // pred_fallthru
          _
      $region12: #{tpu_custom_call.1} parent=5 // pred_fallthru
        _
      %p295 = scmp.lt.s32.totalorder %s24, 2
      // Predicated region
      $region25: #{tpu_custom_call.1} parent=5 // pred_check
        %p296 = pneg %p295
      $region26: #{tpu_custom_call.1} parent=5 // pred_check_branch
        %298 = sbr.rel (%p296) target = $region28
      $region27: #{tpu_custom_call.1} parent=5 // pred_region
        // Predicated region
        $region29: #{tpu_custom_call.1} parent=27 // pred_check
          %p299 = pneg %p56
        $region30: #{tpu_custom_call.1} parent=27 // pred_check_branch
          %301 = sbr.rel (%p299) target = $region32
        $region31: #{tpu_custom_call.1} parent=27 // pred_region
          %s302 = sand.u32 %s46, 1
          %s303 = scalar_lea.sflag [#allocation7], %s302
          %s304 = sand.u32 %s46, 1
          %s305 = smul.addr %s304, 4
          %s306 = scalar_lea.vmem [#allocation6], %s305
          %s308 = ssub.s32 64, 64
          %309 = vsyncadd %s303, %s308
          %s310 = smul.addr %s31, 64
          %s311 = scalar_lea.hbm %s0, %s310
          %s313 = sshll.u32 %s306, 4
          %s314 = int_to_ptr.vmem [resolvable:$true] %s313
          %316 = dma.hbm_to_vmem [thread:$0]  %s311, 64, %s314, %s303
        $region32: #{tpu_custom_call.1} parent=27 // pred_fallthru
          _
        // Predicated region
        $region33: #{tpu_custom_call.1} parent=27 // pred_check
          %p317 = pneg %p84
        $region34: #{tpu_custom_call.1} parent=27 // pred_check_branch
          %319 = sbr.rel (%p317) target = $region36
        $region35: #{tpu_custom_call.1} parent=27 // pred_region
          %s320 = sand.u32 %s24, 1
          %s321 = scalar_lea.sflag [#allocation10], %s320
          %s322 = sand.u32 %s74, 1
          %s323 = smul.addr %s322, 4
          %s324 = scalar_lea.vmem [#allocation9], %s323
          %s326 = ssub.s32 64, 64
          %327 = vsyncadd %s321, %s326
          %s328 = sadd.s32 %s32, %s31
          %s329 = smul.addr %s328, 64
          %s330 = scalar_lea.hbm %s1, %s329
          %s332 = sshll.u32 %s324, 4
          %s333 = int_to_ptr.vmem [resolvable:$true] %s332
          %335 = dma.hbm_to_vmem [thread:$0]  %s330, 64, %s333, %s321
        $region36: #{tpu_custom_call.1} parent=27 // pred_fallthru
          _
        // Predicated region
        $region37: #{tpu_custom_call.1} parent=27 // pred_check
          %p336 = pneg %p112
        $region38: #{tpu_custom_call.1} parent=27 // pred_check_branch
          %338 = sbr.rel (%p336) target = $region40
        $region39: #{tpu_custom_call.1} parent=27 // pred_region
          %p339 = scmp.lt.s32.totalorder %s31, 1
          %s340 = scalar_select %p339, %s31, 1
          %p341 = scmp.lt.s32.totalorder %s32, 0
          %s342 = scalar_select %p341, %s32, 0
          %s343 = smul.addr %s340, 8
          %s344 = sadd.s32 %s342, %s343
          %s345 = smul.addr %s344, 4
          %s346 = scalar_lea.vmem %s2, %s345
        $region40: #{tpu_custom_call.1} parent=27 // pred_fallthru
          _
        // Predicated region
        $region41: #{tpu_custom_call.1} parent=27 // pred_check
          %p347 = pneg %p140
        $region42: #{tpu_custom_call.1} parent=27 // pred_check_branch
          %349 = sbr.rel (%p347) target = $region44
        $region43: #{tpu_custom_call.1} parent=27 // pred_region
          %s350 = sand.u32 %s24, 1
          %s351 = scalar_lea.sflag [#allocation10], %s350
          %s352 = sand.u32 %s130, 1
          %s353 = scalar_lea.vmem [#allocation11], %s352
          %s355 = ssub.s32 16, 16
          %356 = vsyncadd %s351, %s355
          %s357 = sadd.s32 %s32, %s31
          %s358 = smul.addr %s357, 16
          %s359 = scalar_lea.hbm %s3, %s358
          %s361 = sshll.u32 %s353, 4
          %s362 = int_to_ptr.vmem [resolvable:$true] %s361
          %364 = dma.hbm_to_vmem [thread:$0]  %s359, 16, %s362, %s351
        $region44: #{tpu_custom_call.1} parent=27 // pred_fallthru
          _
        // Predicated region
        $region45: #{tpu_custom_call.1} parent=27 // pred_check
          %p365 = pneg %p166
        $region46: #{tpu_custom_call.1} parent=27 // pred_check_branch
          %367 = sbr.rel (%p365) target = $region48
        $region47: #{tpu_custom_call.1} parent=27 // pred_region
          %p368 = scmp.lt.s32.totalorder %s31, 1
          %s369 = scalar_select %p368, %s31, 1
          %s370 = smul.addr %s369, 8
          %s371 = scalar_lea.vmem %s4, %s370
        $region48: #{tpu_custom_call.1} parent=27 // pred_fallthru
          _
      $region28: #{tpu_custom_call.1} parent=5 // pred_fallthru
        _
      %p372 = scmp.le.s32.totalorder 1, %s24
      %p373 = scmp.lt.s32.totalorder %s24, 3
      %p374 = pnand %p372, %p373
      %p375 = pneg %p374
      // Predicated region
      $region49: #{tpu_custom_call.1} parent=5 // pred_check
        _
      $region50: #{tpu_custom_call.1} parent=5 // pred_check_branch
        %377 = sbr.rel (%p374) target = $region52
      $region51: #{tpu_custom_call.1} parent=5 // pred_region
        %s378 = ssub.s32 %s24, 1
        %s379 = sand.u32 %s49, 1
        %s380 = scalar_lea.sflag [#allocation7], %s379
        %s381 = sand.u32 %s49, 1
        %s382 = smul.addr %s381, 4
        %s383 = scalar_lea.vmem [#allocation6], %s382
        // Predicated region
        $region53: #{tpu_custom_call.1} parent=51 // pred_check
          %p384 = pneg %p62
        $region54: #{tpu_custom_call.1} parent=51 // pred_check_branch
          %386 = sbr.rel (%p384) target = $region56
        $region55: #{tpu_custom_call.1} parent=51 // pred_region
          %387 = dma.done %s380, 64
        $region56: #{tpu_custom_call.1} parent=51 // pred_fallthru
          _
        %s388 = sand.u32 %s29, 1
        %s389 = scalar_lea.sflag [#allocation10], %s388
        %s390 = sand.u32 %s77, 1
        %s391 = smul.addr %s390, 4
        %s392 = scalar_lea.vmem [#allocation9], %s391
        // Predicated region
        $region57: #{tpu_custom_call.1} parent=51 // pred_check
          %p393 = pneg %p90
        $region58: #{tpu_custom_call.1} parent=51 // pred_check_branch
          %395 = sbr.rel (%p393) target = $region60
        $region59: #{tpu_custom_call.1} parent=51 // pred_region
          %396 = dma.done %s389, 64
        $region60: #{tpu_custom_call.1} parent=51 // pred_fallthru
          _
        %s397 = sand.u32 %s29, 1
        %s398 = scalar_lea.sflag [#allocation10], %s397
        %s399 = sand.u32 %s133, 1
        %s400 = scalar_lea.vmem [#allocation11], %s399
        // Predicated region
        $region61: #{tpu_custom_call.1} parent=51 // pred_check
          %p401 = pneg %p146
        $region62: #{tpu_custom_call.1} parent=51 // pred_check_branch
          %403 = sbr.rel (%p401) target = $region64
        $region63: #{tpu_custom_call.1} parent=51 // pred_region
          %404 = dma.done %s398, 16
        $region64: #{tpu_custom_call.1} parent=51 // pred_fallthru
          _
        // Predicated region
        $region65: #{tpu_custom_call.1} parent=51 // pred_check
          %p405 = pneg %p214
        $region66: #{tpu_custom_call.1} parent=51 // pred_check_branch
          %407 = sbr.rel (%p405) target = $region68
        $region67: #{tpu_custom_call.1} parent=51 // pred_region
          %408 = dma.done [#allocation13], 512
        $region68: #{tpu_custom_call.1} parent=51 // pred_fallthru
          _
        %s409 = sand.u32 %s49, 1
        %s410 = scalar_lea.sflag [#allocation7], %s409
        %s411 = sand.u32 %s49, 1
        %s412 = smul.addr %s411, 4
        %s413 = scalar_lea.vmem [#allocation6], %s412
        %p414 = pneg %p62
        %p415 = pneg %p59
        %s416 = sand.u32 %s29, 1
        %s417 = scalar_lea.sflag [#allocation10], %s416
        %s418 = sand.u32 %s77, 1
        %s419 = smul.addr %s418, 4
        %s420 = scalar_lea.vmem [#allocation9], %s419
        %p421 = pneg %p90
        %p422 = pneg %p87
        %p423 = scmp.lt.s32.totalorder %s33, 1
        %s424 = scalar_select %p423, %s33, 1
        %p425 = scmp.lt.s32.totalorder %s34, 0
        %s426 = scalar_select %p425, %s34, 0
        %s427 = smul.addr %s424, 8
        %s428 = sadd.s32 %s426, %s427
        %s429 = smul.addr %s428, 4
        %s430 = scalar_lea.vmem %s2, %s429
        %p431 = pneg %p118
        %p432 = pneg %p115
        %s433 = sand.u32 %s29, 1
        %s434 = scalar_lea.sflag [#allocation10], %s433
        %s435 = sand.u32 %s133, 1
        %s436 = scalar_lea.vmem [#allocation11], %s435
        %p437 = pneg %p146
        %p438 = pneg %p143
        %p439 = scmp.lt.s32.totalorder %s33, 1
        %s440 = scalar_select %p439, %s33, 1
        %s441 = smul.addr %s440, 8
        %s442 = scalar_lea.vmem %s4, %s441
        %p443 = pneg %p172
        %p444 = pneg %p169
        %p445 = pneg %p193
        %p446 = pneg %p190
        %p447 = pneg %p214
        %p448 = pneg %p211
        %p449 = pneg %p235
        %p450 = pneg %p232
        %p451 = pneg %p261
        %p452 = pneg %p258
        %s453 = sand.u32 %s248, 1
        %s454 = scalar_lea.sflag [#allocation8], %s453
        %s455 = sand.u32 %s248, 1
        %s456 = smul.addr %s455, 8
        %s457 = scalar_lea.vmem [#allocation14], %s456
        %p458 = scmp.lt.s32.totalorder %s33, 1
        %s459 = scalar_select %p458, %s33, 1
        %p460 = scmp.lt.s32.totalorder %s34, 0
        %s461 = scalar_select %p460, %s34, 0
        %s462 = smul.addr %s459, 8
        %s463 = sadd.s32 %s461, %s462
        %s464 = smul.addr %s463, 4
        %s465 = scalar_lea.vmem %s2, %s464
        %p466 = scmp.lt.s32.totalorder %s33, 1
        %s467 = scalar_select %p466, %s33, 1
        %s468 = smul.addr %s467, 8
        %s469 = scalar_lea.vmem %s4, %s468
        %p471 = scmp.eq.s32.totalorder %s34, 0
        // Predicated region
        $region69: #{tpu_custom_call.1} parent=51 // pred_check
          %p472 = pneg %p471
        $region70: #{tpu_custom_call.1} parent=51 // pred_check_branch
          %474 = sbr.rel (%p472) target = $region72
        $region71: #{tpu_custom_call.1} parent=51 // pred_region
          %vm475 = vcmask 7168
          %476 = vst.msk [vmem:[#allocation3] sm:$0xff] %vm475, -inf
          %477 = vst.msk [vmem:[#allocation4] sm:$0xff] %vm475, 0.0
          %478 = vst [vmem:[#allocation5] sm:$0xff] 0.0
          %v479 = vld [vmem:[%s383] sm:$0xf]
          %v480 = vld [vmem:[%s5] sm:$0xf]
          %v481 = vld [vmem:[%s5 + $0x4] sm:$0xf]
          %v482 = vld [vmem:[%s5 + $0x8] sm:$0xf]
          %v483 = vld [vmem:[%s5 + $0xc] sm:$0xf]
          %v488 = vunpack.c.l.b16 %v480
          %v489 = vunpack.c.l.b16 %v481
          %v490 = vunpack.c.l.b16 %v482
          %v491 = vunpack.c.l.b16 %v483
          %v492 = vpack.c.b16 %v489, %v488
          %v493 = vpack.c.b16 %v491, %v490
          %vm496 = vcmask 261120
          %v498 = vsel %vm496, %v479, 0
          %500 = vmatprep.subr.bf16.mxu0 0
          %501 = vmatpush1.bf16.msra.mxu0 0
          %502 = vmatprep.subr.bf16.mxu0 0
          %503 = vmatpush1.bf16.msra.mxu0 0
          %504 = vmatprep.subr.bf16.mxu0 0
          %505 = vmatpush1.bf16.msra.mxu0 0
          %506 = vmatprep.subr.bf16.mxu0 0
          %507 = vmatpush1.bf16.msra.mxu0 0
          %508 = vmatprep.subr.bf16.mxu0 0
          %509 = vmatpush1.bf16.msra.mxu0 0
          %510 = vmatprep.subr.bf16.mxu0 0
          %511 = vmatpush1.bf16.msra.mxu0 0
          %512 = vmatprep.subr.bf16.mxu0 0
          %513 = vmatpush1.bf16.msra.mxu0 %v493
          %514 = vmatprep.subr.bf16.mxu0 0
          %515 = vmatpush1.bf16.msra.mxu0 %v492
          %516 = vmatprep.subr.bf16.mxu0 0
          %517 = vmatpush2.bf16.msra.mxu0 0
          %518 = vmatprep.subr.bf16.mxu0 0
          %519 = vmatpush2.bf16.msra.mxu0 0
          %520 = vmatprep.subr.bf16.mxu0 0
          %521 = vmatpush2.bf16.msra.mxu0 0
          %522 = vmatprep.subr.bf16.mxu0 0
          %523 = vmatpush2.bf16.msra.mxu0 0
          %524 = vmatprep.subr.bf16.mxu0 0
          %525 = vmatpush2.bf16.msra.mxu0 0
          %526 = vmatprep.subr.bf16.mxu0 0
          %527 = vmatpush2.bf16.msra.mxu0 0
          %528 = vmatprep.subr.bf16.mxu0 0
          %529 = vmatpush2.bf16.msra.mxu0 0
          %530 = vmatprep.subr.bf16.mxu0 0
          %531 = vmatpush2.bf16.msra.mxu0 0
          %532 = vmatprep.mubr.bf16.mxu0 0
          %533 = vmatmul.mubr.bf16.gmra.mxu0 %v498
          %v534 = vpop.f32.mrf.mxu0
          %v535 = vadd.f32 0.0, %v534
          %v536 = vpop.f32.mrf.mxu0
          %v537 = vpop.f32.mrf.mxu0
          %v538 = vpop.f32.mrf.mxu0
          %539 = vdwg.mxu0
          %v540 = vmul.f32 %v535, 0.25
          %vm541 = vcmask 130048
          %542 = vst.msk [vmem:[#allocation2] sm:$0xff] %vm541, %v540
        $region72: #{tpu_custom_call.1} parent=51 // pred_fallthru
          _
        %v543 = vld [vmem:[%s392] sm:$0xf]
        %v544 = vld [vmem:[#allocation12] sm:$0xff]
        %v545 = vld [vmem:[#allocation12 + $0x8] sm:$0xff]
        %v546 = vld [vmem:[#allocation12 + $0x10] sm:$0xff]
        %v547 = vld [vmem:[#allocation12 + $0x18] sm:$0xff]
        %v552 = vunpack.c.l.b16 %v544
        %v553 = vunpack.c.h.b16 %v544
        %v554 = vunpack.c.l.b16 %v545
        %v555 = vunpack.c.h.b16 %v545
        %v556 = vunpack.c.l.b16 %v546
        %v557 = vunpack.c.h.b16 %v546
        %v558 = vunpack.c.l.b16 %v547
        %v559 = vunpack.c.h.b16 %v547
        %v560 = vpack.c.b16 %v554, %v552
        %v561 = vpack.c.b16 %v555, %v553
        %v562 = vpack.c.b16 %v558, %v556
        %v563 = vpack.c.b16 %v559, %v557
        %vm568 = vcmask 261120
        %v570 = vsel %vm568, %v543, 0
        %572 = vmatprep.subr.bf16.mxu0 0
        %573 = vmatpush1.bf16.msra.mxu0 0
        %574 = vmatprep.subr.bf16.mxu0 0
        %575 = vmatpush1.bf16.msra.mxu0 0
        %576 = vmatprep.subr.bf16.mxu0 0
        %577 = vmatpush1.bf16.msra.mxu0 0
        %578 = vmatprep.subr.bf16.mxu0 0
        %579 = vmatpush1.bf16.msra.mxu0 0
        %580 = vmatprep.subr.bf16.mxu0 0
        %581 = vmatpush1.bf16.msra.mxu0 0
        %582 = vmatprep.subr.bf16.mxu0 0
        %583 = vmatpush1.bf16.msra.mxu0 0
        %584 = vmatprep.subr.bf16.mxu0 %v563
        %585 = vmatpush1.bf16.msra.mxu0 %v562
        %586 = vmatprep.subr.bf16.mxu0 %v561
        %587 = vmatpush1.bf16.msra.mxu0 %v560
        %588 = vmatprep.subr.bf16.mxu0 0
        %589 = vmatpush2.bf16.msra.mxu0 0
        %590 = vmatprep.subr.bf16.mxu0 0
        %591 = vmatpush2.bf16.msra.mxu0 0
        %592 = vmatprep.subr.bf16.mxu0 0
        %593 = vmatpush2.bf16.msra.mxu0 0
        %594 = vmatprep.subr.bf16.mxu0 0
        %595 = vmatpush2.bf16.msra.mxu0 0
        %596 = vmatprep.subr.bf16.mxu0 0
        %597 = vmatpush2.bf16.msra.mxu0 0
        %598 = vmatprep.subr.bf16.mxu0 0
        %599 = vmatpush2.bf16.msra.mxu0 0
        %600 = vmatprep.subr.bf16.mxu0 0
        %601 = vmatpush2.bf16.msra.mxu0 0
        %602 = vmatprep.subr.bf16.mxu0 0
        %603 = vmatpush2.bf16.msra.mxu0 0
        %604 = vmatprep.mubr.bf16.mxu0 0
        %605 = vmatmul.mubr.bf16.gmra.mxu0 %v570
        %v606 = vpop.f32.mrf.mxu0
        %v607 = vadd.f32 0.0, %v606
        %v608 = vpop.f32.mrf.mxu0
        %v609 = vadd.f32 0.0, %v608
        %v610 = vpop.f32.mrf.mxu0
        %v611 = vpop.f32.mrf.mxu0
        %612 = vdwg.mxu0
        %v613 = vpack.c.bf16 %v607, %v607
        %v614 = vld [vmem:[%s465] sm:$0xf]
        %v615 = vld [vmem:[%s465 + $0x4] sm:$0xf]
        %v616 = vld [vmem:[%s465 + $0x8] sm:$0xf]
        %v617 = vld [vmem:[%s465 + $0xc] sm:$0xf]
        %v618 = vld [vmem:[%s465 + $0x10] sm:$0xf]
        %v619 = vld [vmem:[%s465 + $0x14] sm:$0xf]
        %v620 = vld [vmem:[%s465 + $0x18] sm:$0xf]
        %v621 = vld [vmem:[%s465 + $0x1c] sm:$0xf]
        %v622 = vld [vmem:[%s7] sm:$0xf]
        %v623 = vld [vmem:[%s7 + $0x4] sm:$0xf]
        %v624 = vld [vmem:[%s7 + $0x8] sm:$0xf]
        %v625 = vld [vmem:[%s7 + $0xc] sm:$0xf]
        %v634 = vunpack.c.l.b16 %v614
        %v635 = vunpack.c.l.b16 %v615
        %v636 = vunpack.c.l.b16 %v616
        %v637 = vunpack.c.l.b16 %v617
        %v638 = vunpack.c.l.b16 %v618
        %v639 = vunpack.c.l.b16 %v619
        %v640 = vunpack.c.l.b16 %v620
        %v641 = vunpack.c.l.b16 %v621
        %v642 = vpack.c.b16 %v635, %v634
        %v643 = vpack.c.b16 %v637, %v636
        %v644 = vpack.c.b16 %v639, %v638
        %v645 = vpack.c.b16 %v641, %v640
        %v650 = vunpack.c.l.b16 %v622
        %v651 = vunpack.c.l.b16 %v623
        %v652 = vunpack.c.l.b16 %v624
        %v653 = vunpack.c.l.b16 %v625
        %v654 = vpack.c.b16 %v651, %v650
        %v655 = vpack.c.b16 %v653, %v652
        %v659 = vsel %vm568, %v642, 0
        %v662 = vsel %vm568, %v643, 0
        %v665 = vsel %vm568, %v644, 0
        %v668 = vsel %vm568, %v645, 0
        %670 = vmatprep.subr.bf16.mxu0 0
        %671 = vmatpush1.bf16.msra.mxu0 0
        %672 = vmatprep.subr.bf16.mxu0 0
        %673 = vmatpush1.bf16.msra.mxu0 0
        %674 = vmatprep.subr.bf16.mxu0 0
        %675 = vmatpush1.bf16.msra.mxu0 0
        %676 = vmatprep.subr.bf16.mxu0 0
        %677 = vmatpush1.bf16.msra.mxu0 0
        %678 = vmatprep.subr.bf16.mxu0 0
        %679 = vmatpush1.bf16.msra.mxu0 0
        %680 = vmatprep.subr.bf16.mxu0 0
        %681 = vmatpush1.bf16.msra.mxu0 0
        %682 = vmatprep.subr.bf16.mxu0 0
        %683 = vmatpush1.bf16.msra.mxu0 %v655
        %684 = vmatprep.subr.bf16.mxu0 0
        %685 = vmatpush1.bf16.msra.mxu0 %v654
        %686 = vmatprep.subr.bf16.mxu0 0
        %687 = vmatpush2.bf16.msra.mxu0 0
        %688 = vmatprep.subr.bf16.mxu0 0
        %689 = vmatpush2.bf16.msra.mxu0 0
        %690 = vmatprep.subr.bf16.mxu0 0
        %691 = vmatpush2.bf16.msra.mxu0 0
        %692 = vmatprep.subr.bf16.mxu0 0
        %693 = vmatpush2.bf16.msra.mxu0 0
        %694 = vmatprep.subr.bf16.mxu0 0
        %695 = vmatpush2.bf16.msra.mxu0 0
        %696 = vmatprep.subr.bf16.mxu0 0
        %697 = vmatpush2.bf16.msra.mxu0 0
        %698 = vmatprep.subr.bf16.mxu0 0
        %699 = vmatpush2.bf16.msra.mxu0 0
        %700 = vmatprep.subr.bf16.mxu0 0
        %701 = vmatpush2.bf16.msra.mxu0 0
        %702 = vmatprep.mubr.bf16.mxu0 0
        %703 = vmatmul.mubr.bf16.gmra.mxu0 %v659
        %v704 = vpop.f32.mrf.mxu0
        %v705 = vadd.f32 0.0, %v704
        %v706 = vpop.f32.mrf.mxu0
        %v707 = vpop.f32.mrf.mxu0
        %v708 = vadd.f32 0.0, %v707
        %v709 = vpop.f32.mrf.mxu0
        %710 = vmatprep.mubr.bf16.mxu0 0
        %711 = vmatmul.mubr.bf16.gmra.mxu0 %v662
        %v712 = vpop.f32.mrf.mxu0
        %v713 = vadd.f32 0.0, %v712
        %v714 = vpop.f32.mrf.mxu0
        %v715 = vpop.f32.mrf.mxu0
        %v716 = vadd.f32 0.0, %v715
        %v717 = vpop.f32.mrf.mxu0
        %718 = vmatprep.mubr.bf16.mxu0 0
        %719 = vmatmul.mubr.bf16.gmra.mxu0 %v665
        %v720 = vpop.f32.mrf.mxu0
        %v721 = vadd.f32 0.0, %v720
        %v722 = vpop.f32.mrf.mxu0
        %v723 = vpop.f32.mrf.mxu0
        %v724 = vadd.f32 0.0, %v723
        %v725 = vpop.f32.mrf.mxu0
        %726 = vmatprep.mubr.bf16.mxu0 0
        %727 = vmatmul.mubr.bf16.gmra.mxu0 %v668
        %v728 = vpop.f32.mrf.mxu0
        %v729 = vadd.f32 0.0, %v728
        %v730 = vpop.f32.mrf.mxu0
        %v731 = vpop.f32.mrf.mxu0
        %v732 = vadd.f32 0.0, %v731
        %v733 = vpop.f32.mrf.mxu0
        %734 = vdwg.mxu0
        %v735 = vmul.f32 %v705, %v609
        %v736 = vmul.f32 %v708, %v609
        %v737 = vmul.f32 %v713, %v609
        %v738 = vmul.f32 %v716, %v609
        %v739 = vmul.f32 %v721, %v609
        %v740 = vmul.f32 %v724, %v609
        %v741 = vmul.f32 %v729, %v609
        %v742 = vmul.f32 %v732, %v609
        %v743 = vld [vmem:[#allocation2] sm:$0xff]
        %v745 = vcombine.high %v743, %v743
        %v747 = vunpack.c.l.s4 1966171168
        %v748 = vunpack.c.0.s8 %v747
        %v749 = vlaneseq
        %v750 = vshrl.u32 %v749, 7
        %v751 = vsub.s32 %v748, %v750
        %v752 = vrot.slane %v743, %v751
        %v754 = vunpack.c.l.s4 1966171168
        %v755 = vunpack.c.0.s8 %v754
        %v756 = vlaneseq
        %v757 = vshrl.u32 %v756, 7
        %v758 = vsub.s32 %v755, %v757
        %v759 = vrot.slane %v745, %v758
        %v760 = vcombine.high %v752, %v752
        %v761 = vcombine.high %v759, %v759
        %v763 = vunpack.c.l.s4 1966171168
        %v764 = vunpack.c.0.s8 %v763
        %v765 = vlaneseq
        %v766 = vshrl.u32 %v765, 7
        %v767 = vsub.s32 %v764, %v766
        %v768 = vrot.slane %v752, %v767
        %v770 = vunpack.c.l.s4 1966171168
        %v771 = vunpack.c.0.s8 %v770
        %v772 = vlaneseq
        %v773 = vshrl.u32 %v772, 7
        %v774 = vsub.s32 %v771, %v773
        %v775 = vrot.slane %v759, %v774
        %v777 = vunpack.c.l.s4 1966171168
        %v778 = vunpack.c.0.s8 %v777
        %v779 = vlaneseq
        %v780 = vshrl.u32 %v779, 7
        %v781 = vsub.s32 %v778, %v780
        %v782 = vrot.slane %v760, %v781
        %v784 = vunpack.c.l.s4 1966171168
        %v785 = vunpack.c.0.s8 %v784
        %v786 = vlaneseq
        %v787 = vshrl.u32 %v786, 7
        %v788 = vsub.s32 %v785, %v787
        %v789 = vrot.slane %v761, %v788
        %v790 = vcombine.high %v768, %v768
        %v791 = vcombine.high %v775, %v775
        %v792 = vcombine.high %v782, %v782
        %v793 = vcombine.high %v789, %v789
        %vm794 = vcmask 130048
        %v795 = vsel %vm794, %v768, 0
        %v798 = vsel %vm794, %v735, 0
        %800 = vmatprep.subr.mxu0 0.0
        %801 = vmatpush1.xpose.msra.mxu0 0.0
        %802 = vmatprep.subr.mxu0 0.0
        %803 = vmatpush1.xpose.msra.mxu0 0.0
        %804 = vmatprep.subr.mxu0 0.0
        %805 = vmatpush1.xpose.msra.mxu0 0.0
        %806 = vmatprep.subr.mxu0 0.0
        %807 = vmatpush1.xpose.msra.mxu0 0.0
        %808 = vmatprep.subr.mxu0 0.0
        %809 = vmatpush1.xpose.msra.mxu0 0.0
        %810 = vmatprep.subr.mxu0 0.0
        %811 = vmatpush1.xpose.msra.mxu0 0.0
        %812 = vmatprep.subr.mxu0 0.0
        %813 = vmatpush1.xpose.msra.mxu0 0.0
        %814 = vmatprep.subr.mxu0 0.0
        %815 = vmatpush1.xpose.msra.mxu0 0.0
        %816 = vmatprep.subr.mxu0 0.0
        %817 = vmatpush1.xpose.msra.mxu0 0.0
        %818 = vmatprep.subr.mxu0 0.0
        %819 = vmatpush1.xpose.msra.mxu0 0.0
        %820 = vmatprep.subr.mxu0 0.0
        %821 = vmatpush1.xpose.msra.mxu0 0.0
        %822 = vmatprep.subr.mxu0 0.0
        %823 = vmatpush1.xpose.msra.mxu0 0.0
        %824 = vmatprep.subr.mxu0 0.0
        %825 = vmatpush1.xpose.msra.mxu0 0.0
        %826 = vmatprep.subr.mxu0 0.0
        %827 = vmatpush1.xpose.msra.mxu0 0.0
        %828 = vmatprep.subr.mxu0 0.0
        %829 = vmatpush1.xpose.msra.mxu0 0.0
        %830 = vmatprep.subr.mxu0 0.0
        %831 = vmatpush1.xpose.msra.mxu0 %v798
        %832 = vmatprep.subr.mxu0 0.0
        %833 = vmatpush2.xpose.msra.mxu0 0.0
        %834 = vmatprep.subr.mxu0 0.0
        %835 = vmatpush2.xpose.msra.mxu0 0.0
        %836 = vmatprep.subr.mxu0 0.0
        %837 = vmatpush2.xpose.msra.mxu0 0.0
        %838 = vmatprep.subr.mxu0 0.0
        %839 = vmatpush2.xpose.msra.mxu0 0.0
        %840 = vmatprep.subr.mxu0 0.0
        %841 = vmatpush2.xpose.msra.mxu0 0.0
        %842 = vmatprep.subr.mxu0 0.0
        %843 = vmatpush2.xpose.msra.mxu0 0.0
        %844 = vmatprep.subr.mxu0 0.0
        %845 = vmatpush2.xpose.msra.mxu0 0.0
        %846 = vmatprep.subr.mxu0 0.0
        %847 = vmatpush2.xpose.msra.mxu0 0.0
        %848 = vmatprep.subr.mxu0 0.0
        %849 = vmatpush2.xpose.msra.mxu0 0.0
        %850 = vmatprep.subr.mxu0 0.0
        %851 = vmatpush2.xpose.msra.mxu0 0.0
        %852 = vmatprep.subr.mxu0 0.0
        %853 = vmatpush2.xpose.msra.mxu0 0.0
        %854 = vmatprep.subr.mxu0 0.0
        %855 = vmatpush2.xpose.msra.mxu0 0.0
        %856 = vmatprep.subr.mxu0 0.0
        %857 = vmatpush2.xpose.msra.mxu0 0.0
        %858 = vmatprep.subr.mxu0 0.0
        %859 = vmatpush2.xpose.msra.mxu0 0.0
        %860 = vmatprep.subr.mxu0 0.0
        %861 = vmatpush2.xpose.msra.mxu0 0.0
        %862 = vmatprep.subr.mxu0 0.0
        %863 = vmatpush2.xpose.msra.mxu0 0.0
        %864 = vmatprep.mubr.f32.mxu0 0.0
        %865 = vmatmul.mubr.f32.gmra.mxu0 %v795
        %v866 = vpop.f32.mrf.mxu0
        %v867 = vadd.f32 0.0, %v866
        %v868 = vpop.f32.mrf.mxu0
        %869 = vdwg.mxu0
        %v870 = vsel %vm794, %v782, 0
        %v873 = vsel %vm794, %v736, 0
        %875 = vmatprep.subr.mxu0 0.0
        %876 = vmatpush1.xpose.msra.mxu0 0.0
        %877 = vmatprep.subr.mxu0 0.0
        %878 = vmatpush1.xpose.msra.mxu0 0.0
        %879 = vmatprep.subr.mxu0 0.0
        %880 = vmatpush1.xpose.msra.mxu0 0.0
        %881 = vmatprep.subr.mxu0 0.0
        %882 = vmatpush1.xpose.msra.mxu0 0.0
        %883 = vmatprep.subr.mxu0 0.0
        %884 = vmatpush1.xpose.msra.mxu0 0.0
        %885 = vmatprep.subr.mxu0 0.0
        %886 = vmatpush1.xpose.msra.mxu0 0.0
        %887 = vmatprep.subr.mxu0 0.0
        %888 = vmatpush1.xpose.msra.mxu0 0.0
        %889 = vmatprep.subr.mxu0 0.0
        %890 = vmatpush1.xpose.msra.mxu0 0.0
        %891 = vmatprep.subr.mxu0 0.0
        %892 = vmatpush1.xpose.msra.mxu0 0.0
        %893 = vmatprep.subr.mxu0 0.0
        %894 = vmatpush1.xpose.msra.mxu0 0.0
        %895 = vmatprep.subr.mxu0 0.0
        %896 = vmatpush1.xpose.msra.mxu0 0.0
        %897 = vmatprep.subr.mxu0 0.0
        %898 = vmatpush1.xpose.msra.mxu0 0.0
        %899 = vmatprep.subr.mxu0 0.0
        %900 = vmatpush1.xpose.msra.mxu0 0.0
        %901 = vmatprep.subr.mxu0 0.0
        %902 = vmatpush1.xpose.msra.mxu0 0.0
        %903 = vmatprep.subr.mxu0 0.0
        %904 = vmatpush1.xpose.msra.mxu0 0.0
        %905 = vmatprep.subr.mxu0 0.0
        %906 = vmatpush1.xpose.msra.mxu0 %v873
        %907 = vmatprep.subr.mxu0 0.0
        %908 = vmatpush2.xpose.msra.mxu0 0.0
        %909 = vmatprep.subr.mxu0 0.0
        %910 = vmatpush2.xpose.msra.mxu0 0.0
        %911 = vmatprep.subr.mxu0 0.0
        %912 = vmatpush2.xpose.msra.mxu0 0.0
        %913 = vmatprep.subr.mxu0 0.0
        %914 = vmatpush2.xpose.msra.mxu0 0.0
        %915 = vmatprep.subr.mxu0 0.0
        %916 = vmatpush2.xpose.msra.mxu0 0.0
        %917 = vmatprep.subr.mxu0 0.0
        %918 = vmatpush2.xpose.msra.mxu0 0.0
        %919 = vmatprep.subr.mxu0 0.0
        %920 = vmatpush2.xpose.msra.mxu0 0.0
        %921 = vmatprep.subr.mxu0 0.0
        %922 = vmatpush2.xpose.msra.mxu0 0.0
        %923 = vmatprep.subr.mxu0 0.0
        %924 = vmatpush2.xpose.msra.mxu0 0.0
        %925 = vmatprep.subr.mxu0 0.0
        %926 = vmatpush2.xpose.msra.mxu0 0.0
        %927 = vmatprep.subr.mxu0 0.0
        %928 = vmatpush2.xpose.msra.mxu0 0.0
        %929 = vmatprep.subr.mxu0 0.0
        %930 = vmatpush2.xpose.msra.mxu0 0.0
        %931 = vmatprep.subr.mxu0 0.0
        %932 = vmatpush2.xpose.msra.mxu0 0.0
        %933 = vmatprep.subr.mxu0 0.0
        %934 = vmatpush2.xpose.msra.mxu0 0.0
        %935 = vmatprep.subr.mxu0 0.0
        %936 = vmatpush2.xpose.msra.mxu0 0.0
        %937 = vmatprep.subr.mxu0 0.0
        %938 = vmatpush2.xpose.msra.mxu0 0.0
        %939 = vmatprep.mubr.f32.mxu0 0.0
        %940 = vmatmul.mubr.f32.gmra.mxu0 %v870
        %v941 = vpop.f32.mrf.mxu0
        %v942 = vadd.f32 0.0, %v941
        %v943 = vpop.f32.mrf.mxu0
        %944 = vdwg.mxu0
        %v945 = vsel %vm794, %v790, 0
        %v948 = vsel %vm794, %v737, 0
        %950 = vmatprep.subr.mxu0 0.0
        %951 = vmatpush1.xpose.msra.mxu0 0.0
        %952 = vmatprep.subr.mxu0 0.0
        %953 = vmatpush1.xpose.msra.mxu0 0.0
        %954 = vmatprep.subr.mxu0 0.0
        %955 = vmatpush1.xpose.msra.mxu0 0.0
        %956 = vmatprep.subr.mxu0 0.0
        %957 = vmatpush1.xpose.msra.mxu0 0.0
        %958 = vmatprep.subr.mxu0 0.0
        %959 = vmatpush1.xpose.msra.mxu0 0.0
        %960 = vmatprep.subr.mxu0 0.0
        %961 = vmatpush1.xpose.msra.mxu0 0.0
        %962 = vmatprep.subr.mxu0 0.0
        %963 = vmatpush1.xpose.msra.mxu0 0.0
        %964 = vmatprep.subr.mxu0 0.0
        %965 = vmatpush1.xpose.msra.mxu0 0.0
        %966 = vmatprep.subr.mxu0 0.0
        %967 = vmatpush1.xpose.msra.mxu0 0.0
        %968 = vmatprep.subr.mxu0 0.0
        %969 = vmatpush1.xpose.msra.mxu0 0.0
        %970 = vmatprep.subr.mxu0 0.0
        %971 = vmatpush1.xpose.msra.mxu0 0.0
        %972 = vmatprep.subr.mxu0 0.0
        %973 = vmatpush1.xpose.msra.mxu0 0.0
        %974 = vmatprep.subr.mxu0 0.0
        %975 = vmatpush1.xpose.msra.mxu0 0.0
        %976 = vmatprep.subr.mxu0 0.0
        %977 = vmatpush1.xpose.msra.mxu0 0.0
        %978 = vmatprep.subr.mxu0 0.0
        %979 = vmatpush1.xpose.msra.mxu0 0.0
        %980 = vmatprep.subr.mxu0 0.0
        %981 = vmatpush1.xpose.msra.mxu0 %v948
        %982 = vmatprep.subr.mxu0 0.0
        %983 = vmatpush2.xpose.msra.mxu0 0.0
        %984 = vmatprep.subr.mxu0 0.0
        %985 = vmatpush2.xpose.msra.mxu0 0.0
        %986 = vmatprep.subr.mxu0 0.0
        %987 = vmatpush2.xpose.msra.mxu0 0.0
        %988 = vmatprep.subr.mxu0 0.0
        %989 = vmatpush2.xpose.msra.mxu0 0.0
        %990 = vmatprep.subr.mxu0 0.0
        %991 = vmatpush2.xpose.msra.mxu0 0.0
        %992 = vmatprep.subr.mxu0 0.0
        %993 = vmatpush2.xpose.msra.mxu0 0.0
        %994 = vmatprep.subr.mxu0 0.0
        %995 = vmatpush2.xpose.msra.mxu0 0.0
        %996 = vmatprep.subr.mxu0 0.0
        %997 = vmatpush2.xpose.msra.mxu0 0.0
        %998 = vmatprep.subr.mxu0 0.0
        %999 = vmatpush2.xpose.msra.mxu0 0.0
        %1000 = vmatprep.subr.mxu0 0.0
        %1001 = vmatpush2.xpose.msra.mxu0 0.0
        %1002 = vmatprep.subr.mxu0 0.0
        %1003 = vmatpush2.xpose.msra.mxu0 0.0
        %1004 = vmatprep.subr.mxu0 0.0
        %1005 = vmatpush2.xpose.msra.mxu0 0.0
        %1006 = vmatprep.subr.mxu0 0.0
        %1007 = vmatpush2.xpose.msra.mxu0 0.0
        %1008 = vmatprep.subr.mxu0 0.0
        %1009 = vmatpush2.xpose.msra.mxu0 0.0
        %1010 = vmatprep.subr.mxu0 0.0
        %1011 = vmatpush2.xpose.msra.mxu0 0.0
        %1012 = vmatprep.subr.mxu0 0.0
        %1013 = vmatpush2.xpose.msra.mxu0 0.0
        %1014 = vmatprep.mubr.f32.mxu0 0.0
        %1015 = vmatmul.mubr.f32.gmra.mxu0 %v945
        %v1016 = vpop.f32.mrf.mxu0
        %v1017 = vadd.f32 0.0, %v1016
        %v1018 = vpop.f32.mrf.mxu0
        %1019 = vdwg.mxu0
        %v1020 = vsel %vm794, %v792, 0
        %v1023 = vsel %vm794, %v738, 0
        %1025 = vmatprep.subr.mxu0 0.0
        %1026 = vmatpush1.xpose.msra.mxu0 0.0
        %1027 = vmatprep.subr.mxu0 0.0
        %1028 = vmatpush1.xpose.msra.mxu0 0.0
        %1029 = vmatprep.subr.mxu0 0.0
        %1030 = vmatpush1.xpose.msra.mxu0 0.0
        %1031 = vmatprep.subr.mxu0 0.0
        %1032 = vmatpush1.xpose.msra.mxu0 0.0
        %1033 = vmatprep.subr.mxu0 0.0
        %1034 = vmatpush1.xpose.msra.mxu0 0.0
        %1035 = vmatprep.subr.mxu0 0.0
        %1036 = vmatpush1.xpose.msra.mxu0 0.0
        %1037 = vmatprep.subr.mxu0 0.0
        %1038 = vmatpush1.xpose.msra.mxu0 0.0
        %1039 = vmatprep.subr.mxu0 0.0
        %1040 = vmatpush1.xpose.msra.mxu0 0.0
        %1041 = vmatprep.subr.mxu0 0.0
        %1042 = vmatpush1.xpose.msra.mxu0 0.0
        %1043 = vmatprep.subr.mxu0 0.0
        %1044 = vmatpush1.xpose.msra.mxu0 0.0
        %1045 = vmatprep.subr.mxu0 0.0
        %1046 = vmatpush1.xpose.msra.mxu0 0.0
        %1047 = vmatprep.subr.mxu0 0.0
        %1048 = vmatpush1.xpose.msra.mxu0 0.0
        %1049 = vmatprep.subr.mxu0 0.0
        %1050 = vmatpush1.xpose.msra.mxu0 0.0
        %1051 = vmatprep.subr.mxu0 0.0
        %1052 = vmatpush1.xpose.msra.mxu0 0.0
        %1053 = vmatprep.subr.mxu0 0.0
        %1054 = vmatpush1.xpose.msra.mxu0 0.0
        %1055 = vmatprep.subr.mxu0 0.0
        %1056 = vmatpush1.xpose.msra.mxu0 %v1023
        %1057 = vmatprep.subr.mxu0 0.0
        %1058 = vmatpush2.xpose.msra.mxu0 0.0
        %1059 = vmatprep.subr.mxu0 0.0
        %1060 = vmatpush2.xpose.msra.mxu0 0.0
        %1061 = vmatprep.subr.mxu0 0.0
        %1062 = vmatpush2.xpose.msra.mxu0 0.0
        %1063 = vmatprep.subr.mxu0 0.0
        %1064 = vmatpush2.xpose.msra.mxu0 0.0
        %1065 = vmatprep.subr.mxu0 0.0
        %1066 = vmatpush2.xpose.msra.mxu0 0.0
        %1067 = vmatprep.subr.mxu0 0.0
        %1068 = vmatpush2.xpose.msra.mxu0 0.0
        %1069 = vmatprep.subr.mxu0 0.0
        %1070 = vmatpush2.xpose.msra.mxu0 0.0
        %1071 = vmatprep.subr.mxu0 0.0
        %1072 = vmatpush2.xpose.msra.mxu0 0.0
        %1073 = vmatprep.subr.mxu0 0.0
        %1074 = vmatpush2.xpose.msra.mxu0 0.0
        %1075 = vmatprep.subr.mxu0 0.0
        %1076 = vmatpush2.xpose.msra.mxu0 0.0
        %1077 = vmatprep.subr.mxu0 0.0
        %1078 = vmatpush2.xpose.msra.mxu0 0.0
        %1079 = vmatprep.subr.mxu0 0.0
        %1080 = vmatpush2.xpose.msra.mxu0 0.0
        %1081 = vmatprep.subr.mxu0 0.0
        %1082 = vmatpush2.xpose.msra.mxu0 0.0
        %1083 = vmatprep.subr.mxu0 0.0
        %1084 = vmatpush2.xpose.msra.mxu0 0.0
        %1085 = vmatprep.subr.mxu0 0.0
        %1086 = vmatpush2.xpose.msra.mxu0 0.0
        %1087 = vmatprep.subr.mxu0 0.0
        %1088 = vmatpush2.xpose.msra.mxu0 0.0
        %1089 = vmatprep.mubr.f32.mxu0 0.0
        %1090 = vmatmul.mubr.f32.gmra.mxu0 %v1020
        %v1091 = vpop.f32.mrf.mxu0
        %v1092 = vadd.f32 0.0, %v1091
        %v1093 = vpop.f32.mrf.mxu0
        %1094 = vdwg.mxu0
        %v1095 = vsel %vm794, %v775, 0
        %v1098 = vsel %vm794, %v739, 0
        %1100 = vmatprep.subr.mxu0 0.0
        %1101 = vmatpush1.xpose.msra.mxu0 0.0
        %1102 = vmatprep.subr.mxu0 0.0
        %1103 = vmatpush1.xpose.msra.mxu0 0.0
        %1104 = vmatprep.subr.mxu0 0.0
        %1105 = vmatpush1.xpose.msra.mxu0 0.0
        %1106 = vmatprep.subr.mxu0 0.0
        %1107 = vmatpush1.xpose.msra.mxu0 0.0
        %1108 = vmatprep.subr.mxu0 0.0
        %1109 = vmatpush1.xpose.msra.mxu0 0.0
        %1110 = vmatprep.subr.mxu0 0.0
        %1111 = vmatpush1.xpose.msra.mxu0 0.0
        %1112 = vmatprep.subr.mxu0 0.0
        %1113 = vmatpush1.xpose.msra.mxu0 0.0
        %1114 = vmatprep.subr.mxu0 0.0
        %1115 = vmatpush1.xpose.msra.mxu0 0.0
        %1116 = vmatprep.subr.mxu0 0.0
        %1117 = vmatpush1.xpose.msra.mxu0 0.0
        %1118 = vmatprep.subr.mxu0 0.0
        %1119 = vmatpush1.xpose.msra.mxu0 0.0
        %1120 = vmatprep.subr.mxu0 0.0
        %1121 = vmatpush1.xpose.msra.mxu0 0.0
        %1122 = vmatprep.subr.mxu0 0.0
        %1123 = vmatpush1.xpose.msra.mxu0 0.0
        %1124 = vmatprep.subr.mxu0 0.0
        %1125 = vmatpush1.xpose.msra.mxu0 0.0
        %1126 = vmatprep.subr.mxu0 0.0
        %1127 = vmatpush1.xpose.msra.mxu0 0.0
        %1128 = vmatprep.subr.mxu0 0.0
        %1129 = vmatpush1.xpose.msra.mxu0 0.0
        %1130 = vmatprep.subr.mxu0 0.0
        %1131 = vmatpush1.xpose.msra.mxu0 %v1098
        %1132 = vmatprep.subr.mxu0 0.0
        %1133 = vmatpush2.xpose.msra.mxu0 0.0
        %1134 = vmatprep.subr.mxu0 0.0
        %1135 = vmatpush2.xpose.msra.mxu0 0.0
        %1136 = vmatprep.subr.mxu0 0.0
        %1137 = vmatpush2.xpose.msra.mxu0 0.0
        %1138 = vmatprep.subr.mxu0 0.0
        %1139 = vmatpush2.xpose.msra.mxu0 0.0
        %1140 = vmatprep.subr.mxu0 0.0
        %1141 = vmatpush2.xpose.msra.mxu0 0.0
        %1142 = vmatprep.subr.mxu0 0.0
        %1143 = vmatpush2.xpose.msra.mxu0 0.0
        %1144 = vmatprep.subr.mxu0 0.0
        %1145 = vmatpush2.xpose.msra.mxu0 0.0
        %1146 = vmatprep.subr.mxu0 0.0
        %1147 = vmatpush2.xpose.msra.mxu0 0.0
        %1148 = vmatprep.subr.mxu0 0.0
        %1149 = vmatpush2.xpose.msra.mxu0 0.0
        %1150 = vmatprep.subr.mxu0 0.0
        %1151 = vmatpush2.xpose.msra.mxu0 0.0
        %1152 = vmatprep.subr.mxu0 0.0
        %1153 = vmatpush2.xpose.msra.mxu0 0.0
        %1154 = vmatprep.subr.mxu0 0.0
        %1155 = vmatpush2.xpose.msra.mxu0 0.0
        %1156 = vmatprep.subr.mxu0 0.0
        %1157 = vmatpush2.xpose.msra.mxu0 0.0
        %1158 = vmatprep.subr.mxu0 0.0
        %1159 = vmatpush2.xpose.msra.mxu0 0.0
        %1160 = vmatprep.subr.mxu0 0.0
        %1161 = vmatpush2.xpose.msra.mxu0 0.0
        %1162 = vmatprep.subr.mxu0 0.0
        %1163 = vmatpush2.xpose.msra.mxu0 0.0
        %1164 = vmatprep.mubr.f32.mxu0 0.0
        %1165 = vmatmul.mubr.f32.gmra.mxu0 %v1095
        %v1166 = vpop.f32.mrf.mxu0
        %v1167 = vadd.f32 0.0, %v1166
        %v1168 = vpop.f32.mrf.mxu0
        %1169 = vdwg.mxu0
        %v1170 = vsel %vm794, %v789, 0
        %v1173 = vsel %vm794, %v740, 0
        %1175 = vmatprep.subr.mxu0 0.0
        %1176 = vmatpush1.xpose.msra.mxu0 0.0
        %1177 = vmatprep.subr.mxu0 0.0
        %1178 = vmatpush1.xpose.msra.mxu0 0.0
        %1179 = vmatprep.subr.mxu0 0.0
        %1180 = vmatpush1.xpose.msra.mxu0 0.0
        %1181 = vmatprep.subr.mxu0 0.0
        %1182 = vmatpush1.xpose.msra.mxu0 0.0
        %1183 = vmatprep.subr.mxu0 0.0
        %1184 = vmatpush1.xpose.msra.mxu0 0.0
        %1185 = vmatprep.subr.mxu0 0.0
        %1186 = vmatpush1.xpose.msra.mxu0 0.0
        %1187 = vmatprep.subr.mxu0 0.0
        %1188 = vmatpush1.xpose.msra.mxu0 0.0
        %1189 = vmatprep.subr.mxu0 0.0
        %1190 = vmatpush1.xpose.msra.mxu0 0.0
        %1191 = vmatprep.subr.mxu0 0.0
        %1192 = vmatpush1.xpose.msra.mxu0 0.0
        %1193 = vmatprep.subr.mxu0 0.0
        %1194 = vmatpush1.xpose.msra.mxu0 0.0
        %1195 = vmatprep.subr.mxu0 0.0
        %1196 = vmatpush1.xpose.msra.mxu0 0.0
        %1197 = vmatprep.subr.mxu0 0.0
        %1198 = vmatpush1.xpose.msra.mxu0 0.0
        %1199 = vmatprep.subr.mxu0 0.0
        %1200 = vmatpush1.xpose.msra.mxu0 0.0
        %1201 = vmatprep.subr.mxu0 0.0
        %1202 = vmatpush1.xpose.msra.mxu0 0.0
        %1203 = vmatprep.subr.mxu0 0.0
        %1204 = vmatpush1.xpose.msra.mxu0 0.0
        %1205 = vmatprep.subr.mxu0 0.0
        %1206 = vmatpush1.xpose.msra.mxu0 %v1173
        %1207 = vmatprep.subr.mxu0 0.0
        %1208 = vmatpush2.xpose.msra.mxu0 0.0
        %1209 = vmatprep.subr.mxu0 0.0
        %1210 = vmatpush2.xpose.msra.mxu0 0.0
        %1211 = vmatprep.subr.mxu0 0.0
        %1212 = vmatpush2.xpose.msra.mxu0 0.0
        %1213 = vmatprep.subr.mxu0 0.0
        %1214 = vmatpush2.xpose.msra.mxu0 0.0
        %1215 = vmatprep.subr.mxu0 0.0
        %1216 = vmatpush2.xpose.msra.mxu0 0.0
        %1217 = vmatprep.subr.mxu0 0.0
        %1218 = vmatpush2.xpose.msra.mxu0 0.0
        %1219 = vmatprep.subr.mxu0 0.0
        %1220 = vmatpush2.xpose.msra.mxu0 0.0
        %1221 = vmatprep.subr.mxu0 0.0
        %1222 = vmatpush2.xpose.msra.mxu0 0.0
        %1223 = vmatprep.subr.mxu0 0.0
        %1224 = vmatpush2.xpose.msra.mxu0 0.0
        %1225 = vmatprep.subr.mxu0 0.0
        %1226 = vmatpush2.xpose.msra.mxu0 0.0
        %1227 = vmatprep.subr.mxu0 0.0
        %1228 = vmatpush2.xpose.msra.mxu0 0.0
        %1229 = vmatprep.subr.mxu0 0.0
        %1230 = vmatpush2.xpose.msra.mxu0 0.0
        %1231 = vmatprep.subr.mxu0 0.0
        %1232 = vmatpush2.xpose.msra.mxu0 0.0
        %1233 = vmatprep.subr.mxu0 0.0
        %1234 = vmatpush2.xpose.msra.mxu0 0.0
        %1235 = vmatprep.subr.mxu0 0.0
        %1236 = vmatpush2.xpose.msra.mxu0 0.0
        %1237 = vmatprep.subr.mxu0 0.0
        %1238 = vmatpush2.xpose.msra.mxu0 0.0
        %1239 = vmatprep.mubr.f32.mxu0 0.0
        %1240 = vmatmul.mubr.f32.gmra.mxu0 %v1170
        %v1241 = vpop.f32.mrf.mxu0
        %v1242 = vadd.f32 0.0, %v1241
        %v1243 = vpop.f32.mrf.mxu0
        %1244 = vdwg.mxu0
        %v1245 = vsel %vm794, %v791, 0
        %v1248 = vsel %vm794, %v741, 0
        %1250 = vmatprep.subr.mxu0 0.0
        %1251 = vmatpush1.xpose.msra.mxu0 0.0
        %1252 = vmatprep.subr.mxu0 0.0
        %1253 = vmatpush1.xpose.msra.mxu0 0.0
        %1254 = vmatprep.subr.mxu0 0.0
        %1255 = vmatpush1.xpose.msra.mxu0 0.0
        %1256 = vmatprep.subr.mxu0 0.0
        %1257 = vmatpush1.xpose.msra.mxu0 0.0
        %1258 = vmatprep.subr.mxu0 0.0
        %1259 = vmatpush1.xpose.msra.mxu0 0.0
        %1260 = vmatprep.subr.mxu0 0.0
        %1261 = vmatpush1.xpose.msra.mxu0 0.0
        %1262 = vmatprep.subr.mxu0 0.0
        %1263 = vmatpush1.xpose.msra.mxu0 0.0
        %1264 = vmatprep.subr.mxu0 0.0
        %1265 = vmatpush1.xpose.msra.mxu0 0.0
        %1266 = vmatprep.subr.mxu0 0.0
        %1267 = vmatpush1.xpose.msra.mxu0 0.0
        %1268 = vmatprep.subr.mxu0 0.0
        %1269 = vmatpush1.xpose.msra.mxu0 0.0
        %1270 = vmatprep.subr.mxu0 0.0
        %1271 = vmatpush1.xpose.msra.mxu0 0.0
        %1272 = vmatprep.subr.mxu0 0.0
        %1273 = vmatpush1.xpose.msra.mxu0 0.0
        %1274 = vmatprep.subr.mxu0 0.0
        %1275 = vmatpush1.xpose.msra.mxu0 0.0
        %1276 = vmatprep.subr.mxu0 0.0
        %1277 = vmatpush1.xpose.msra.mxu0 0.0
        %1278 = vmatprep.subr.mxu0 0.0
        %1279 = vmatpush1.xpose.msra.mxu0 0.0
        %1280 = vmatprep.subr.mxu0 0.0
        %1281 = vmatpush1.xpose.msra.mxu0 %v1248
        %1282 = vmatprep.subr.mxu0 0.0
        %1283 = vmatpush2.xpose.msra.mxu0 0.0
        %1284 = vmatprep.subr.mxu0 0.0
        %1285 = vmatpush2.xpose.msra.mxu0 0.0
        %1286 = vmatprep.subr.mxu0 0.0
        %1287 = vmatpush2.xpose.msra.mxu0 0.0
        %1288 = vmatprep.subr.mxu0 0.0
        %1289 = vmatpush2.xpose.msra.mxu0 0.0
        %1290 = vmatprep.subr.mxu0 0.0
        %1291 = vmatpush2.xpose.msra.mxu0 0.0
        %1292 = vmatprep.subr.mxu0 0.0
        %1293 = vmatpush2.xpose.msra.mxu0 0.0
        %1294 = vmatprep.subr.mxu0 0.0
        %1295 = vmatpush2.xpose.msra.mxu0 0.0
        %1296 = vmatprep.subr.mxu0 0.0
        %1297 = vmatpush2.xpose.msra.mxu0 0.0
        %1298 = vmatprep.subr.mxu0 0.0
        %1299 = vmatpush2.xpose.msra.mxu0 0.0
        %1300 = vmatprep.subr.mxu0 0.0
        %1301 = vmatpush2.xpose.msra.mxu0 0.0
        %1302 = vmatprep.subr.mxu0 0.0
        %1303 = vmatpush2.xpose.msra.mxu0 0.0
        %1304 = vmatprep.subr.mxu0 0.0
        %1305 = vmatpush2.xpose.msra.mxu0 0.0
        %1306 = vmatprep.subr.mxu0 0.0
        %1307 = vmatpush2.xpose.msra.mxu0 0.0
        %1308 = vmatprep.subr.mxu0 0.0
        %1309 = vmatpush2.xpose.msra.mxu0 0.0
        %1310 = vmatprep.subr.mxu0 0.0
        %1311 = vmatpush2.xpose.msra.mxu0 0.0
        %1312 = vmatprep.subr.mxu0 0.0
        %1313 = vmatpush2.xpose.msra.mxu0 0.0
        %1314 = vmatprep.mubr.f32.mxu0 0.0
        %1315 = vmatmul.mubr.f32.gmra.mxu0 %v1245
        %v1316 = vpop.f32.mrf.mxu0
        %v1317 = vadd.f32 0.0, %v1316
        %v1318 = vpop.f32.mrf.mxu0
        %1319 = vdwg.mxu0
        %v1320 = vsel %vm794, %v793, 0
        %v1323 = vsel %vm794, %v742, 0
        %1325 = vmatprep.subr.mxu0 0.0
        %1326 = vmatpush1.xpose.msra.mxu0 0.0
        %1327 = vmatprep.subr.mxu0 0.0
        %1328 = vmatpush1.xpose.msra.mxu0 0.0
        %1329 = vmatprep.subr.mxu0 0.0
        %1330 = vmatpush1.xpose.msra.mxu0 0.0
        %1331 = vmatprep.subr.mxu0 0.0
        %1332 = vmatpush1.xpose.msra.mxu0 0.0
        %1333 = vmatprep.subr.mxu0 0.0
        %1334 = vmatpush1.xpose.msra.mxu0 0.0
        %1335 = vmatprep.subr.mxu0 0.0
        %1336 = vmatpush1.xpose.msra.mxu0 0.0
        %1337 = vmatprep.subr.mxu0 0.0
        %1338 = vmatpush1.xpose.msra.mxu0 0.0
        %1339 = vmatprep.subr.mxu0 0.0
        %1340 = vmatpush1.xpose.msra.mxu0 0.0
        %1341 = vmatprep.subr.mxu0 0.0
        %1342 = vmatpush1.xpose.msra.mxu0 0.0
        %1343 = vmatprep.subr.mxu0 0.0
        %1344 = vmatpush1.xpose.msra.mxu0 0.0
        %1345 = vmatprep.subr.mxu0 0.0
        %1346 = vmatpush1.xpose.msra.mxu0 0.0
        %1347 = vmatprep.subr.mxu0 0.0
        %1348 = vmatpush1.xpose.msra.mxu0 0.0
        %1349 = vmatprep.subr.mxu0 0.0
        %1350 = vmatpush1.xpose.msra.mxu0 0.0
        %1351 = vmatprep.subr.mxu0 0.0
        %1352 = vmatpush1.xpose.msra.mxu0 0.0
        %1353 = vmatprep.subr.mxu0 0.0
        %1354 = vmatpush1.xpose.msra.mxu0 0.0
        %1355 = vmatprep.subr.mxu0 0.0
        %1356 = vmatpush1.xpose.msra.mxu0 %v1323
        %1357 = vmatprep.subr.mxu0 0.0
        %1358 = vmatpush2.xpose.msra.mxu0 0.0
        %1359 = vmatprep.subr.mxu0 0.0
        %1360 = vmatpush2.xpose.msra.mxu0 0.0
        %1361 = vmatprep.subr.mxu0 0.0
        %1362 = vmatpush2.xpose.msra.mxu0 0.0
        %1363 = vmatprep.subr.mxu0 0.0
        %1364 = vmatpush2.xpose.msra.mxu0 0.0
        %1365 = vmatprep.subr.mxu0 0.0
        %1366 = vmatpush2.xpose.msra.mxu0 0.0
        %1367 = vmatprep.subr.mxu0 0.0
        %1368 = vmatpush2.xpose.msra.mxu0 0.0
        %1369 = vmatprep.subr.mxu0 0.0
        %1370 = vmatpush2.xpose.msra.mxu0 0.0
        %1371 = vmatprep.subr.mxu0 0.0
        %1372 = vmatpush2.xpose.msra.mxu0 0.0
        %1373 = vmatprep.subr.mxu0 0.0
        %1374 = vmatpush2.xpose.msra.mxu0 0.0
        %1375 = vmatprep.subr.mxu0 0.0
        %1376 = vmatpush2.xpose.msra.mxu0 0.0
        %1377 = vmatprep.subr.mxu0 0.0
        %1378 = vmatpush2.xpose.msra.mxu0 0.0
        %1379 = vmatprep.subr.mxu0 0.0
        %1380 = vmatpush2.xpose.msra.mxu0 0.0
        %1381 = vmatprep.subr.mxu0 0.0
        %1382 = vmatpush2.xpose.msra.mxu0 0.0
        %1383 = vmatprep.subr.mxu0 0.0
        %1384 = vmatpush2.xpose.msra.mxu0 0.0
        %1385 = vmatprep.subr.mxu0 0.0
        %1386 = vmatpush2.xpose.msra.mxu0 0.0
        %1387 = vmatprep.subr.mxu0 0.0
        %1388 = vmatpush2.xpose.msra.mxu0 0.0
        %1389 = vmatprep.mubr.f32.mxu0 0.0
        %1390 = vmatmul.mubr.f32.gmra.mxu0 %v1320
        %v1391 = vpop.f32.mrf.mxu0
        %v1392 = vadd.f32 0.0, %v1391
        %v1393 = vpop.f32.mrf.mxu0
        %1394 = vdwg.mxu0
        %v1395 = vld [vmem:[%s400] sm:$0x1]
        %v1397 = vlaneseq
        %v1398 = vshrl.u32 %v1397, 7
        %v1399 = vsub.s32 0, %v1398
        %v1400 = vrot.slane %v1395, %v1399
        %v1402 = vadd.f32 %v867, %v1400
        %v1403 = vadd.f32 %v942, %v1400
        %v1404 = vadd.f32 %v1017, %v1400
        %v1405 = vadd.f32 %v1092, %v1400
        %v1406 = vadd.f32 %v1167, %v1400
        %v1407 = vadd.f32 %v1242, %v1400
        %v1408 = vadd.f32 %v1317, %v1400
        %v1409 = vadd.f32 %v1392, %v1400
        %v1410 = vld [vmem:[#allocation3] sm:$0xff]
        %v1419 = vrot.slane %v1403, 7
        %vm1420 = vcmask 1041409
        %v1421 = vsel %vm1420, %v1419, %v1402
        %v1422 = vrot.slane %v1404, 6
        %vm1423 = vcmask 1042434
        %v1424 = vsel %vm1423, %v1422, %v1421
        %v1425 = vrot.slane %v1405, 5
        %vm1426 = vcmask 1043459
        %v1427 = vsel %vm1426, %v1425, %v1424
        %v1428 = vrot.slane %v1406, 4
        %vm1429 = vcmask 1044484
        %v1430 = vsel %vm1429, %v1428, %v1427
        %v1431 = vrot.slane %v1407, 3
        %vm1432 = vcmask 1045509
        %v1433 = vsel %vm1432, %v1431, %v1430
        %v1434 = vrot.slane %v1408, 2
        %vm1435 = vcmask 1046534
        %v1436 = vsel %vm1435, %v1434, %v1433
        %v1437 = vrot.slane %v1409, 1
        %vm1438 = vcmask 1047559
        %v1439 = vsel %vm1438, %v1437, %v1436
        %vm1441 = vcmask 64512
        %v1442 = vsel %vm1441, %v1439, -inf
        %1443 = vmax.xlane.f32.xlu0 %v1442
        %v1444 = vpop.xlane.xlu0 %1443
        %v1445 = vmax.f32 %v1410, %v1444
        %v1446 = vsub.f32 %v1410, %v1445
        %v1447 = vmul.f32 %v1446, 1.442695
        %v1448 = vpow.pop %v1447
        %1450 = vset.pattern.permute.xlu0 0
        %1451 = vperm.xlu0 %1450, %v1445
        %v1452 = vpop.permute.xlu0 %1451
        %v1453 = vrot.slane %v1452, 1
        %v1454 = vrot.slane %v1452, 2
        %v1455 = vrot.slane %v1452, 3
        %v1456 = vrot.slane %v1452, 4
        %v1457 = vrot.slane %v1452, 5
        %v1458 = vrot.slane %v1452, 6
        %v1459 = vrot.slane %v1452, 7
        %v1468 = vsub.f32 %v1402, %v1452
        %v1469 = vsub.f32 %v1403, %v1453
        %v1470 = vsub.f32 %v1404, %v1454
        %v1471 = vsub.f32 %v1405, %v1455
        %v1472 = vsub.f32 %v1406, %v1456
        %v1473 = vsub.f32 %v1407, %v1457
        %v1474 = vsub.f32 %v1408, %v1458
        %v1475 = vsub.f32 %v1409, %v1459
        %v1476 = vmul.f32 %v1468, 1.442695
        %v1477 = vpow.pop %v1476
        %v1478 = vmul.f32 %v1469, 1.442695
        %v1479 = vpow.pop %v1478
        %v1480 = vmul.f32 %v1470, 1.442695
        %v1481 = vpow.pop %v1480
        %v1482 = vmul.f32 %v1471, 1.442695
        %v1483 = vpow.pop %v1482
        %v1484 = vmul.f32 %v1472, 1.442695
        %v1485 = vpow.pop %v1484
        %v1486 = vmul.f32 %v1473, 1.442695
        %v1487 = vpow.pop %v1486
        %v1488 = vmul.f32 %v1474, 1.442695
        %v1489 = vpow.pop %v1488
        %v1490 = vmul.f32 %v1475, 1.442695
        %v1491 = vpow.pop %v1490
        %v1492 = vld [vmem:[#allocation4] sm:$0xff]
        %v1493 = vmul.f32 %v1448, %v1492
        %v1502 = vrot.slane %v1479, 7
        %v1503 = vsel %vm1420, %v1502, %v1477
        %v1504 = vrot.slane %v1481, 6
        %v1505 = vsel %vm1423, %v1504, %v1503
        %v1506 = vrot.slane %v1483, 5
        %v1507 = vsel %vm1426, %v1506, %v1505
        %v1508 = vrot.slane %v1485, 4
        %v1509 = vsel %vm1429, %v1508, %v1507
        %v1510 = vrot.slane %v1487, 3
        %v1511 = vsel %vm1432, %v1510, %v1509
        %v1512 = vrot.slane %v1489, 2
        %v1513 = vsel %vm1435, %v1512, %v1511
        %v1514 = vrot.slane %v1491, 1
        %v1515 = vsel %vm1438, %v1514, %v1513
        %v1517 = vsel %vm1441, %v1515, 0.0
        %1518 = vadd.xlane.f32.xlu0 %v1517
        %v1519 = vpop.xlane.xlu0 %1518
        %v1520 = vadd.f32 %v1493, %v1519
        %vm1521 = vcmask 7168
        %1522 = vst.msk [vmem:[#allocation4] sm:$0xff] %vm1521, %v1520
        %v1523 = vld [vmem:[#allocation5] sm:$0xff]
        %1525 = vset.pattern.permute.xlu0 0
        %1526 = vperm.xlu0 %1525, %v1448
        %v1527 = vpop.permute.xlu0 %1526
        %v1529 = vmul.f32 %v1527, %v1523
        %v1530 = vpack.c.bf16 %v1477, %v1477
        %v1531 = vpack.c.bf16 %v1479, %v1479
        %v1532 = vpack.c.bf16 %v1481, %v1481
        %v1533 = vpack.c.bf16 %v1483, %v1483
        %v1534 = vpack.c.bf16 %v1485, %v1485
        %v1535 = vpack.c.bf16 %v1487, %v1487
        %v1536 = vpack.c.bf16 %v1489, %v1489
        %v1537 = vpack.c.bf16 %v1491, %v1491
        %v1546 = vunpack.c.l.b16 %v1530
        %v1547 = vunpack.c.l.b16 %v1531
        %v1548 = vunpack.c.l.b16 %v1532
        %v1549 = vunpack.c.l.b16 %v1533
        %v1550 = vunpack.c.l.b16 %v1534
        %v1551 = vunpack.c.l.b16 %v1535
        %v1552 = vunpack.c.l.b16 %v1536
        %v1553 = vunpack.c.l.b16 %v1537
        %v1554 = vrot.slane %v1547, 7
        %v1555 = vsel %vm1420, %v1554, %v1546
        %v1556 = vrot.slane %v1548, 6
        %v1557 = vsel %vm1423, %v1556, %v1555
        %v1558 = vrot.slane %v1549, 5
        %v1559 = vsel %vm1426, %v1558, %v1557
        %v1560 = vrot.slane %v1550, 4
        %v1561 = vsel %vm1429, %v1560, %v1559
        %v1562 = vrot.slane %v1551, 3
        %v1563 = vsel %vm1432, %v1562, %v1561
        %v1564 = vrot.slane %v1552, 2
        %v1565 = vsel %vm1435, %v1564, %v1563
        %v1566 = vrot.slane %v1553, 1
        %v1567 = vsel %vm1438, %v1566, %v1565
        %v1568 = vpack.c.b16 %v1567, %v1567
        %v1570 = vsel %vm1441, %v1568, 0
        %vm1572 = vcmask 1043456
        %v1574 = vsel %vm1572, %v613, 0
        %1576 = vmatprep.subr.bf16.mxu0 0
        %1577 = vmatpush1.bf16.msra.mxu0 0
        %1578 = vmatprep.subr.bf16.mxu0 0
        %1579 = vmatpush1.bf16.msra.mxu0 0
        %1580 = vmatprep.subr.bf16.mxu0 0
        %1581 = vmatpush1.bf16.msra.mxu0 0
        %1582 = vmatprep.subr.bf16.mxu0 0
        %1583 = vmatpush1.bf16.msra.mxu0 0
        %1584 = vmatprep.subr.bf16.mxu0 0
        %1585 = vmatpush1.bf16.msra.mxu0 0
        %1586 = vmatprep.subr.bf16.mxu0 0
        %1587 = vmatpush1.bf16.msra.mxu0 0
        %1588 = vmatprep.subr.bf16.mxu0 0
        %1589 = vmatpush1.bf16.msra.mxu0 0
        %1590 = vmatprep.subr.bf16.mxu0 0
        %1591 = vmatpush1.bf16.msra.mxu0 %v1574
        %1592 = vmatprep.subr.bf16.mxu0 0
        %1593 = vmatpush2.bf16.msra.mxu0 0
        %1594 = vmatprep.subr.bf16.mxu0 0
        %1595 = vmatpush2.bf16.msra.mxu0 0
        %1596 = vmatprep.subr.bf16.mxu0 0
        %1597 = vmatpush2.bf16.msra.mxu0 0
        %1598 = vmatprep.subr.bf16.mxu0 0
        %1599 = vmatpush2.bf16.msra.mxu0 0
        %1600 = vmatprep.subr.bf16.mxu0 0
        %1601 = vmatpush2.bf16.msra.mxu0 0
        %1602 = vmatprep.subr.bf16.mxu0 0
        %1603 = vmatpush2.bf16.msra.mxu0 0
        %1604 = vmatprep.subr.bf16.mxu0 0
        %1605 = vmatpush2.bf16.msra.mxu0 0
        %1606 = vmatprep.subr.bf16.mxu0 0
        %1607 = vmatpush2.bf16.msra.mxu0 0
        %1608 = vmatprep.mubr.bf16.mxu0 0
        %1609 = vmatmul.mubr.bf16.gmra.mxu0 %v1570
        %v1610 = vpop.f32.mrf.mxu0
        %v1611 = vadd.f32 0.0, %v1610
        %v1612 = vpop.f32.mrf.mxu0
        %v1613 = vpop.f32.mrf.mxu0
        %v1614 = vpop.f32.mrf.mxu0
        %1615 = vdwg.mxu0
        %v1616 = vadd.f32 %v1529, %v1611
        %1617 = vst [vmem:[#allocation5] sm:$0xff] %v1616
        %1618 = vst.msk [vmem:[#allocation3] sm:$0xff] %vm1521, %v1445
        // Predicated region
        $region73: #{tpu_custom_call.1} parent=51 // pred_check
          %p1619 = pneg %p471
        $region74: #{tpu_custom_call.1} parent=51 // pred_check_branch
          %1621 = sbr.rel (%p1619) target = $region76
        $region75: #{tpu_custom_call.1} parent=51 // pred_region
          %v1622 = vld [vmem:[#allocation4] sm:$0xff]
          %v1623 = vrcp.pop %v1622
          %v1624 = vld [vmem:[#allocation5] sm:$0xff]
          %1626 = vset.pattern.permute.xlu0 0
          %1627 = vperm.xlu0 %1626, %v1623
          %v1628 = vpop.permute.xlu0 %1627
          %v1630 = vmul.f32 %v1624, %v1628
          %v1631 = vld [vmem:[%s469] sm:$0xff]
          %1633 = vset.pattern.permute.xlu0 0
          %1634 = vperm.xlu0 %1633, %v1631
          %v1635 = vpop.permute.xlu0 %1634
          %v1637 = vmul.f32 %v1630, %v1635
          %1638 = vst [vmem:[%s457] sm:$0xff] %v1637
        $region76: #{tpu_custom_call.1} parent=51 // pred_fallthru
          _
        %s1639 = sand.u32 %s248, 1
        %s1640 = scalar_lea.sflag [#allocation8], %s1639
        %s1641 = sand.u32 %s248, 1
        %s1642 = smul.addr %s1641, 8
        %s1643 = scalar_lea.vmem [#allocation14], %s1642
        // Predicated region
        $region77: #{tpu_custom_call.1} parent=51 // pred_check
          %p1644 = pneg %p258
        $region78: #{tpu_custom_call.1} parent=51 // pred_check_branch
          %1646 = sbr.rel (%p1644) target = $region80
        $region79: #{tpu_custom_call.1} parent=51 // pred_region
          %s1648 = ssub.s32 128, 128
          %1649 = vsyncadd %s1640, %s1648
          %s1650 = smul.addr %s33, 128
          %s1651 = scalar_lea.hbm %s8, %s1650
          %s1653 = sshll.u32 %s1643, 4
          %s1654 = int_to_ptr.vmem [resolvable:$true] %s1653
          %1656 = dma.vmem_to_hbm [thread:$0]  %s1654, 128, %s1651, %s1640
        $region80: #{tpu_custom_call.1} parent=51 // pred_fallthru
          _
      $region52: #{tpu_custom_call.1} parent=5 // pred_fallthru
        _
      %p1657 = scmp.le.s32.totalorder 2, %s24
      // Predicated region
      $region81: #{tpu_custom_call.1} parent=5 // pred_check
        %p1658 = pneg %p1657
      $region82: #{tpu_custom_call.1} parent=5 // pred_check_branch
        %1660 = sbr.rel (%p1658) target = $region84
      $region83: #{tpu_custom_call.1} parent=5 // pred_region
        %s1661 = ssub.s32 %s24, 2
        // Predicated region
        $region85: #{tpu_custom_call.1} parent=83 // pred_check
          %p1662 = pneg %p264
        $region86: #{tpu_custom_call.1} parent=83 // pred_check_branch
          %1664 = sbr.rel (%p1662) target = $region88
        $region87: #{tpu_custom_call.1} parent=83 // pred_region
          %s1665 = sand.u32 %s249, 1
          %s1666 = scalar_lea.sflag [#allocation8], %s1665
          %s1667 = sand.u32 %s249, 1
          %s1668 = smul.addr %s1667, 8
          %s1669 = scalar_lea.vmem [#allocation14], %s1668
          %1670 = dma.done %s1666, 128
        $region88: #{tpu_custom_call.1} parent=83 // pred_fallthru
          _
      $region84: #{tpu_custom_call.1} parent=5 // pred_fallthru
        _
    $region6: #{tpu_custom_call.1} parent=1 // loop_footer
      %s28 = sadd.s32 1, %s24
    $region7: #{tpu_custom_call.1} parent=1 // loop_footer_branch
      %23 = sbr.rel target = $region3
    $region8: #{tpu_custom_call.1} parent=1 // loop_exit
      _
    %1671 = vsyncpa [#allocation7], 1
    %s1672 = scalar_lea.sflag [#allocation7], 1
    %1673 = vsyncpa %s1672, 1
    %1674 = vsyncpa [#allocation10], 1
    %s1675 = scalar_lea.sflag [#allocation10], 1
    %1676 = vsyncpa %s1675, 1
    %1677 = vsyncpa [#allocation13], 1
    %1678 = vsyncpa [#allocation8], 1
    %s1679 = scalar_lea.sflag [#allocation8], 1
    %1680 = vsyncpa %s1679, 1

</llo_original>
